<compile_context>
chip_gen: v7x
topology: tpu7x:2x2x1
jax: 0.10.0
libtpu: 0.0.40
codegen_flags: <defaults>
</compile_context>

<pallas_src>
import functools

import jax
import jax.numpy as jnp
from jax.experimental import pallas as pl
from jax.experimental.pallas import tpu as pltpu

S, B, C = 7, 2, 3
OUT_DIM = S * S * (5 * B + C)          # 7*7*13 = 637
BN_EPS = 1e-5

# (cin, cout, kernel, stride, pad, maxpool) — matches the nn.Sequential order.
CONV_CFG = [
    # conv1
    (3,   64, 7, 2, 3, True),
    (64, 192, 3, 1, 1, True),
    # conv2
    (192, 128, 1, 1, 0, False),
    (128, 256, 3, 1, 1, False),
    (256, 256, 1, 1, 0, False),
    (256, 512, 3, 1, 1, True),
    # conv3
    (512, 256, 1, 1, 0, False), (256, 512, 3, 1, 1, False),
    (512, 256, 1, 1, 0, False), (256, 512, 3, 1, 1, False),
    (512, 256, 1, 1, 0, False), (256, 512, 3, 1, 1, False),
    (512, 256, 1, 1, 0, False), (256, 512, 3, 1, 1, False),
    (512, 512, 1, 1, 0, False), (512, 1024, 3, 1, 1, True),
    # conv4
    (1024, 512, 1, 1, 0, False), (512, 1024, 3, 1, 1, False),
    (1024, 512, 1, 1, 0, False), (512, 1024, 3, 1, 1, False),
    (1024, 1024, 3, 1, 1, False), (1024, 1024, 3, 2, 1, False),
    # conv5
    (1024, 1024, 3, 1, 1, False), (1024, 1024, 3, 1, 1, False),
]


def _round_up(x, m):
    return (x + m - 1) // m * m


# ---------------------------------------------------------------------------
# Fused Pallas kernel:  out = act( (A @ B) * scale + shift )
# grid = (M/tm, N/tn, K/tk); K is the last ("arbitrary") reduction axis.
# A, B are bf16; the accumulator and epilogue are f32.
# ---------------------------------------------------------------------------
def _make_kernel(activation):
    def kernel(a_ref, b_ref, scale_ref, shift_ref, o_ref, acc_ref):
        @pl.when(pl.program_id(2) == 0)
        def _():
            acc_ref[...] = jnp.zeros_like(acc_ref)

        acc_ref[...] += jnp.dot(a_ref[...], b_ref[...],
                                preferred_element_type=jnp.float32)

        @pl.when(pl.program_id(2) == pl.num_programs(2) - 1)
        def _():
            y = acc_ref[...] * scale_ref[...] + shift_ref[...]
            if activation == "leaky":
                y = jnp.where(y > 0, y, 0.1 * y)
            elif activation == "sigmoid":
                y = 1.0 / (1.0 + jnp.exp(-y))
            o_ref[...] = y.astype(o_ref.dtype)

    return kernel


_KERNELS = {"leaky": _make_kernel("leaky"), "sigmoid": _make_kernel("sigmoid")}


def _pick_tiles(M, K, N):
    """Per-layer tile sizes (all static)."""
    # M: single block when it fits; 16-granular padding (bf16 sublane packing).
    Mp = _round_up(M, 16)
    if Mp <= 512:
        tm = Mp
    else:
        tm = 512
        Mp = _round_up(M, 512)
    # K: round up to the lane width only (zero-padded), then one full-K block
    # if it fits, otherwise the largest 128-multiple divisor <= 2048.
    Kp = _round_up(K, 128)
    if Kp <= 2048:
        tk = Kp
    else:
        tk = 128
        for cand in range(2048, 127, -128):
            if Kp % cand == 0:
                tk = cand
                break
    # N: lane-dense output tiles up to 512 wide.
    Np = _round_up(N, 128)
    if Np <= 512:
        tn = Np
    elif Np % 512 == 0:
        tn = 512
    elif Np % 256 == 0:
        tn = 256
    else:
        tn = 128
    return Mp, Kp, Np, tm, tk, tn


@functools.partial(jax.jit, static_argnames=("activation", "out_dtype"))
def fused_matmul(a, b, scale, shift, *, activation, out_dtype=jnp.float32):
    """act((a @ b) * scale + shift); bf16 operands, f32 accumulate/epilogue."""
    M, K = a.shape
    K2, N = b.shape
    assert K == K2
    Mp, Kp, Np, tm, tk, tn = _pick_tiles(M, K, N)

    # Cast + (minimal) zero-pad fuse into a single XLA pass under this jit.
    a_p = jnp.pad(a.astype(jnp.bfloat16), ((0, Mp - M), (0, Kp - K)))
    b_p = jnp.pad(b.astype(jnp.bfloat16), ((0, Kp - K), (0, Np - N)))
    s_p = jnp.pad(scale.reshape(1, -1).astype(jnp.float32), ((0, 0), (0, Np - N)))
    t_p = jnp.pad(shift.reshape(1, -1).astype(jnp.float32), ((0, 0), (0, Np - N)))

    out = pl.pallas_call(
        _KERNELS[activation],
        out_shape=jax.ShapeDtypeStruct((Mp, Np), out_dtype),
        grid_spec=pltpu.PrefetchScalarGridSpec(
            num_scalar_prefetch=0,
            grid=(Mp // tm, Np // tn, Kp // tk),
            in_specs=[
                pl.BlockSpec((tm, tk), lambda i, j, k: (i, k)),
                pl.BlockSpec((tk, tn), lambda i, j, k: (k, j)),
                pl.BlockSpec((1, tn), lambda i, j, k: (0, j)),   # K-invariant
                pl.BlockSpec((1, tn), lambda i, j, k: (0, j)),   # K-invariant
            ],
            out_specs=pl.BlockSpec((tm, tn), lambda i, j, k: (i, j)),
            scratch_shapes=[pltpu.VMEM((tm, tn), jnp.float32)],
        ),
        compiler_params=pltpu.CompilerParams(
            dimension_semantics=("parallel", "parallel", "arbitrary"),
            vmem_limit_bytes=48 * 1024 * 1024),
    )(a_p, b_p, s_p, t_p)
    return out[:M, :N]


# ---------------------------------------------------------------------------
# CNNBlock = Conv2d -> BatchNorm2d(eval) -> LeakyReLU(0.1) [-> MaxPool2d(2)]
# x is NHWC bf16; the block returns NHWC bf16.
# ---------------------------------------------------------------------------
def cnn_block(x, params, k, stride, pad, maxpool):
    w, b, gamma, beta, rmean, rvar = params
    n = x.shape[0]
    if pad:
        x = jnp.pad(x, ((0, 0), (pad, pad), (pad, pad), (0, 0)))
    hp, wp, cin = x.shape[1], x.shape[2], x.shape[3]
    oh = (hp - k) // stride + 1
    ow = (wp - k) // stride + 1

    if k == 1 and stride == 1:
        patches = x.reshape(n * oh * ow, cin)
    else:
        cols = [x[:, i:i + stride * oh:stride, j:j + stride * ow:stride, :]
                for i in range(k) for j in range(k)]
        patches = jnp.concatenate(cols, axis=-1).reshape(n * oh * ow, k * k * cin)

    w_mat = w.reshape(k * k * cin, -1)            # (k,k,cin,cout) -> (k*k*cin, cout)

    # Fold conv bias + eval-mode BatchNorm into per-channel scale / shift.
    inv = gamma / jnp.sqrt(rvar + BN_EPS)
    scale = inv
    shift = (b - rmean) * inv + beta

    y = fused_matmul(patches, w_mat, scale, shift,
                     activation="leaky", out_dtype=jnp.bfloat16)
    cout = w_mat.shape[1]
    y = y.reshape(n, oh, ow, cout)
    if maxpool:
        # channels stay the (lane) minor dim; XLA fuses reshape+max in one pass
        y = y.reshape(n, oh // 2, 2, ow // 2, 2, cout).max(axis=(2, 4))
    return y


# ---------------------------------------------------------------------------
# Parameter initialization (mirrors _initialize_weights)
# ---------------------------------------------------------------------------
def _final_hw(img_hw):
    hw = img_hw
    for (_, _, k, s, p, mp) in CONV_CFG:
        hw = (hw + 2 * p - k) // s + 1
        if mp:
            hw //= 2
    return hw


def init_params(key, img_hw):
    conv_params = []
    for (cin, cout, k, s, p, mp) in CONV_CFG:
        key, wk = jax.random.split(key)
        std = (2.0 / (cin * k * k)) ** 0.5        # kaiming_normal, fan_in, leaky_relu
        w = jax.random.normal(wk, (k, k, cin, cout), jnp.float32) * std
        conv_params.append((
            w,
            jnp.zeros((cout,), jnp.float32),      # conv bias
            jnp.ones((cout,), jnp.float32),       # bn gamma
            jnp.zeros((cout,), jnp.float32),      # bn beta
            jnp.zeros((cout,), jnp.float32),      # bn running mean
            jnp.ones((cout,), jnp.float32),       # bn running var
        ))

    # Flatten dim follows the feature map (7*7*1024 at the reference 448 input).
    hw = _final_hw(img_hw)
    fc_in = hw * hw * 1024
    key, k1, k2 = jax.random.split(key, 3)
    w1 = jax.random.normal(k1, (fc_in, 4096), jnp.float32) * 0.01
    b1 = jnp.zeros((4096,), jnp.float32)
    w2 = jax.random.normal(k2, (4096, OUT_DIM), jnp.float32) * 0.01
    b2 = jnp.zeros((OUT_DIM,), jnp.float32)
    return conv_params, (w1, b1, w2, b2)


# ---------------------------------------------------------------------------
# Full YOLO forward
# ---------------------------------------------------------------------------
def yolo_forward(x_nchw, conv_params, fc_params):
    x = jnp.transpose(x_nchw, (0, 2, 3, 1)).astype(jnp.bfloat16)   # NCHW -> NHWC
    for p, (cin, cout, k, s, pad, mp) in zip(conv_params, CONV_CFG):
        x = cnn_block(x, p, k, s, pad, mp)

    # nn.Flatten on NCHW order
    n = x.shape[0]
    x = jnp.transpose(x, (0, 3, 1, 2)).reshape(n, -1)

    w1, b1, w2, b2 = fc_params
    ones1 = jnp.ones((w1.shape[1],), jnp.float32)
    h = fused_matmul(x, w1, ones1, b1,
                     activation="leaky", out_dtype=jnp.bfloat16)   # Linear+LeakyReLU
    # Dropout(0.2): identity in eval mode.
    ones2 = jnp.ones((w2.shape[1],), jnp.float32)
    out = fused_matmul(h, w2, ones2, b2,
                       activation="sigmoid", out_dtype=jnp.float32)  # Linear+Sigmoid
    return out.reshape(-1, S, S, 5 * B + C)


if __name__ == "__main__":
    # Small test size (the reference PyTorch model uses 448x448 -> 7x7x1024;
    # the same code runs that size by setting IMG_HW = 448).  64 keeps the
    # full 24-conv-layer + 2-FC architecture while staying fast enough for
    # interpret-mode verification.
    IMG_HW = 64

    key = jax.random.PRNGKey(0)
    key, pk, xk = jax.random.split(key, 3)
    conv_params, fc_params = init_params(pk, IMG_HW)

    x = jax.random.normal(xk, (2, 3, IMG_HW, IMG_HW), jnp.float32)

    y = yolo_forward(x, conv_params, fc_params)
    jax.block_until_ready(y)

    assert y.shape == (2, S, S, 5 * B + C), y.shape
    assert bool(jnp.all(jnp.isfinite(y)))
    assert bool(jnp.all((y >= 0.0) & (y <= 1.0)))   # sigmoid output range
    print("KERNEL_OK")
</pallas_src>

<mosaic_0001>
module attributes {stable_mosaic.version = 11 : i64} {
  func.func @kernel(%arg0: i32, %arg1: i32, %arg2: i32, %arg3: memref<512x256xbf16, #tpu.memory_space<vmem>>, %arg4: memref<256x128xbf16, #tpu.memory_space<vmem>>, %arg5: memref<1x128xf32, #tpu.memory_space<vmem>>, %arg6: memref<1x128xf32, #tpu.memory_space<vmem>>, %arg7: memref<512x128xbf16, #tpu.memory_space<vmem>>, %arg8: memref<512x128xf32, #tpu.memory_space<vmem>>) attributes {dimension_semantics = [#tpu.dimension_semantics<parallel>, #tpu.dimension_semantics<parallel>, #tpu.dimension_semantics<arbitrary>], iteration_bounds = array<i64: 4, 1, 1>, scalar_prefetch = 0 : i64, scratch_operands = 1 : i64, tpu.core_type = #tpu.core_type<tc>, window_params = [{transform_indices = @transform_0, window_bounds = array<i64: 512, 256>}, {transform_indices = @transform_1, window_bounds = array<i64: 256, 128>}, {transform_indices = @transform_2, window_bounds = array<i64: 1, 128>}, {transform_indices = @transform_3, window_bounds = array<i64: 1, 128>}, {transform_indices = @transform_4, window_bounds = array<i64: 512, 128>}]} {
    %c0_i32 = arith.constant 0 : i32
    %0 = arith.cmpi eq, %arg2, %c0_i32 : i32
    %1 = arith.extui %0 : i1 to i32
    %c0_i32_0 = arith.constant 0 : i32
    %2 = arith.cmpi ne, %1, %c0_i32_0 : i32
    scf.if %2 {
      %cst_10 = arith.constant 0.000000e+00 : f32
      %12 = vector.broadcast %cst_10 : f32 to vector<512x128xf32>
      %c0_11 = arith.constant 0 : index
      %c0_12 = arith.constant 0 : index
      %13 = vector.load %arg8[%c0_11, %c0_12] : memref<512x128xf32, #tpu.memory_space<vmem>>, vector<512x128xf32>
      tpu.vector_store %arg8[%c0_11, %c0_12], %12 {strides = array<i32>} : memref<512x128xf32, #tpu.memory_space<vmem>>, vector<512x128xf32>,
    } else {
    }
    %c0 = arith.constant 0 : index
    %c0_1 = arith.constant 0 : index
    %3 = vector.load %arg8[%c0, %c0_1] : memref<512x128xf32, #tpu.memory_space<vmem>>, vector<512x128xf32>
    %c0_2 = arith.constant 0 : index
    %c0_3 = arith.constant 0 : index
    %4 = vector.load %arg3[%c0_2, %c0_3] : memref<512x256xbf16, #tpu.memory_space<vmem>>, vector<512x256xbf16>
    %c0_4 = arith.constant 0 : index
    %c0_5 = arith.constant 0 : index
    %5 = vector.load %arg4[%c0_4, %c0_5] : memref<256x128xbf16, #tpu.memory_space<vmem>>, vector<256x128xbf16>
    %cst = arith.constant dense<0.000000e+00> : vector<512x128xf32>
    %6 = tpu.matmul %4, %5, %cst {dimension_numbers = #tpu.dot_dimension_numbers<[1], [0], [0], [1], [0, 0, 1, 1], [], []>} : vector<512x256xbf16>, vector<256x128xbf16>, vector<512x128xf32> -> vector<512x128xf32>
    %7 = arith.addf %3, %6 : vector<512x128xf32>
    %c0_6 = arith.constant 0 : index
    %c0_7 = arith.constant 0 : index
    %8 = vector.load %arg8[%c0_6, %c0_7] : memref<512x128xf32, #tpu.memory_space<vmem>>, vector<512x128xf32>
    tpu.vector_store %arg8[%c0_6, %c0_7], %7 {strides = array<i32>} : memref<512x128xf32, #tpu.memory_space<vmem>>, vector<512x128xf32>,
    %c0_i32_8 = arith.constant 0 : i32
    %9 = arith.cmpi eq, %arg2, %c0_i32_8 : i32
    %10 = arith.extui %9 : i1 to i32
    %c0_i32_9 = arith.constant 0 : i32
    %11 = arith.cmpi ne, %10, %c0_i32_9 : i32
    scf.if %11 {
      %c0_10 = arith.constant 0 : index
      %c0_11 = arith.constant 0 : index
      %12 = vector.load %arg8[%c0_10, %c0_11] : memref<512x128xf32, #tpu.memory_space<vmem>>, vector<512x128xf32>
      %c0_12 = arith.constant 0 : index
      %c0_13 = arith.constant 0 : index
      %13 = vector.load %arg5[%c0_12, %c0_13] : memref<1x128xf32, #tpu.memory_space<vmem>>, vector<1x128xf32>
      %14 = vector.broadcast %13 : vector<1x128xf32> to vector<512x128xf32>
      %15 = arith.mulf %12, %14 : vector<512x128xf32>
      %c0_14 = arith.constant 0 : index
      %c0_15 = arith.constant 0 : index
      %16 = vector.load %arg6[%c0_14, %c0_15] : memref<1x128xf32, #tpu.memory_space<vmem>>, vector<1x128xf32>
      %17 = vector.broadcast %16 : vector<1x128xf32> to vector<512x128xf32>
      %18 = arith.addf %15, %17 : vector<512x128xf32>
      %cst_16 = arith.constant 0.000000e+00 : f32
      %19 = vector.broadcast %cst_16 : f32 to vector<512x128xf32>
      %20 = arith.cmpf ogt, %18, %19 : vector<512x128xf32>
      %cst_17 = arith.constant 1.000000e-01 : f32
      %21 = vector.broadcast %cst_17 : f32 to vector<512x128xf32>
      %22 = arith.mulf %21, %18 : vector<512x128xf32>
      %23 = arith.select %20, %18, %22 : vector<512x128xi1>, vector<512x128xf32>
      %24 = arith.truncf %23 : vector<512x128xf32> to vector<512x128xbf16>
      %c0_18 = arith.constant 0 : index
      %c0_19 = arith.constant 0 : index
      %25 = vector.load %arg7[%c0_18, %c0_19] : memref<512x128xbf16, #tpu.memory_space<vmem>>, vector<512x128xbf16>
      tpu.vector_store %arg7[%c0_18, %c0_19], %24 {strides = array<i32>} : memref<512x128xbf16, #tpu.memory_space<vmem>>, vector<512x128xbf16>,
    } else {
    }
    return
  }
  func.func @transform_0(%arg0: i32, %arg1: i32, %arg2: i32) -> (i32, i32) {
    %c0_i32 = arith.constant 0 : i32
    return %arg0, %arg2 : i32, i32
  }
  func.func @transform_1(%arg0: i32, %arg1: i32, %arg2: i32) -> (i32, i32) {
    %c0_i32 = arith.constant 0 : i32
    return %arg2, %arg1 : i32, i32
  }
  func.func @transform_2(%arg0: i32, %arg1: i32, %arg2: i32) -> (i32, i32) {
    %c0_i32 = arith.constant 0 : i32
    %c0_i32_0 = arith.constant 0 : i32
    return %c0_i32, %arg1 : i32, i32
  }
  func.func @transform_3(%arg0: i32, %arg1: i32, %arg2: i32) -> (i32, i32) {
    %c0_i32 = arith.constant 0 : i32
    %c0_i32_0 = arith.constant 0 : i32
    return %c0_i32, %arg1 : i32, i32
  }
  func.func @transform_4(%arg0: i32, %arg1: i32, %arg2: i32) -> (i32, i32) {
    %c0_i32 = arith.constant 0 : i32
    return %arg0, %arg1 : i32, i32
  }
}

</mosaic_0001>

<llo_original>
// kernel: fused_matmul.1
$region0: #{fused_matmul.1}
  #allocation0 [shape = 'u32[]', space=smem, size = 0x4, offset = 0x4, fixed_abs, tag = 'smem constant byte address 0x4 - core index']
  #allocation1 [shape = 'u32[144,128]{1,0:T(1,128)}', space=vmem, size = 0x12000, scoped, tag = 'internal scratch']
  #allocation2 [shape = 'f32[512,128]{1,0:T(8,128)}', space=vmem, size = 0x40000, scoped, tag = 'scratch operand']
  %s0 = inlined_call_operand.vmem [shape: bf16[2048,256], index: 0, kind: input, shape index: {}]
  %s1 = inlined_call_operand.vmem [shape: bf16[256,128], index: 1, kind: input, shape index: {}]
  %s2 = inlined_call_operand.vmem [shape: f32[1,128], index: 2, kind: input, shape index: {}]
  %s3 = inlined_call_operand.vmem [shape: f32[1,128], index: 3, kind: input, shape index: {}]
  %s4 = inlined_call_operand.vmem [shape: bf16[2048,128], index: 4, kind: output, shape index: {}]
  %s5 = sld [smem:[#allocation0]]
  $region57: #{fused_matmul.1} parent=0
    _
  %s7 = ssub.s32 1, %s5
  %s8 = scalar_select 0, %s7, %s5
  loop: start=0, step=1, limit=6
  $region2: #{fused_matmul.1} parent=0 // loop_pre_header
    _
  $region3: #{fused_matmul.1} parent=0 // loop_header
    %s10 = sphi 0, %s14
    %p11 = scmp.ge.s32.totalorder %s10, 6
    %s17 = sphi 0, %s36
    %s18 = sphi 0, %s32
    %s19 = sphi 0, %s28
    %s20 = sphi 0, %s17
    %s21 = sphi 0, %s18
    %s22 = sphi 0, %s19
    %s23 = sphi 0, %s20
    %s24 = sphi 0, %s21
    %s25 = sphi 0, %s22
    %s41 = sphi 0, %s43
    %s44 = sphi 0, %s41
    %s45 = sphi 0, %s44
    %s61 = sphi 0, %s45
    %s69 = sphi 0, %s71
    %s72 = sphi 0, %s69
    %s73 = sphi 0, %s72
    %s89 = sphi 0, %s73
    %s95 = sphi 0, %s97
    %s98 = sphi 0, %s95
    %s99 = sphi 0, %s98
    %s115 = sphi 0, %s99
    %s121 = sphi 0, %s123
    %s124 = sphi 0, %s121
    %s125 = sphi 0, %s124
    %s141 = sphi 0, %s125
    %s149 = sphi 0, %s151
    %s152 = sphi 0, %s149
    %s153 = sphi 0, %s152
    %s169 = sphi 0, %s153
  $region4: #{fused_matmul.1} parent=0 // loop_header_branch
    %13 = sbr.rel (%p11) target = $region8
  $region5: #{fused_matmul.1} parent=0 // loop_body
    %s15 = ssub.s32 %s10, 1
    %s16 = ssub.s32 %s10, 2
    %s26 = sadd.s32 1, %s19
    %p27 = scmp.ge.s32.totalorder %s26, 1
    %s28 = scalar_select %p27, 0, %s26
    %s29 = sadd.s32 1, %s18
    %s30 = scalar_select %p27, %s29, %s18
    %p31 = scmp.ge.s32.totalorder %s30, 1
    %s32 = scalar_select %p31, 0, %s30
    %s33 = sadd.s32 1, %s17
    %s34 = scalar_select %p31, %s33, %s17
    %p35 = scmp.ge.s32.totalorder %s34, 4
    %s36 = scalar_select %p35, 0, %s34
    %s37 = ssub.s32 %s17, %s36
    %s38 = ssub.s32 %s19, %s28
    %s39 = sor.u32 %s37, %s38
    %p40 = scmp.eq.s32.totalorder %s39, 0
    %s42 = sadd.s32 %s41, 1
    %s43 = scalar_select %p40, %s41, %s42
    %p46 = pneg %p40
    %p47 = scmp.eq.s32.totalorder %s10, 3
    %p48 = por %p46, %p47
    %p49 = scmp.ne.s32.totalorder %s41, %s44
    %p50 = scmp.eq.s32.totalorder %s10, 0
    %p51 = por %p49, %p50
    %p52 = scmp.ne.s32.totalorder %s41, %s44
    %p53 = scmp.eq.s32.totalorder %s15, 3
    %p54 = por %p52, %p53
    %p55 = scmp.ne.s32.totalorder %s44, %s45
    %p56 = scmp.eq.s32.totalorder %s15, 0
    %p57 = por %p55, %p56
    %p58 = scmp.ne.s32.totalorder %s44, %s45
    %p59 = scmp.eq.s32.totalorder %s16, 3
    %p60 = por %p58, %p59
    %p62 = scmp.ne.s32.totalorder %s45, %s61
    %p63 = scmp.eq.s32.totalorder %s16, 0
    %p64 = por %p62, %p63
    %s65 = ssub.s32 %s19, %s28
    %s66 = ssub.s32 %s18, %s32
    %s67 = sor.u32 %s65, %s66
    %p68 = scmp.eq.s32.totalorder %s67, 0
    %s70 = sadd.s32 %s69, 1
    %s71 = scalar_select %p68, %s69, %s70
    %p74 = pneg %p68
    %p75 = scmp.eq.s32.totalorder %s10, 3
    %p76 = por %p74, %p75
    %p77 = scmp.ne.s32.totalorder %s69, %s72
    %p78 = scmp.eq.s32.totalorder %s10, 0
    %p79 = por %p77, %p78
    %p80 = scmp.ne.s32.totalorder %s69, %s72
    %p81 = scmp.eq.s32.totalorder %s15, 3
    %p82 = por %p80, %p81
    %p83 = scmp.ne.s32.totalorder %s72, %s73
    %p84 = scmp.eq.s32.totalorder %s15, 0
    %p85 = por %p83, %p84
    %p86 = scmp.ne.s32.totalorder %s72, %s73
    %p87 = scmp.eq.s32.totalorder %s16, 3
    %p88 = por %p86, %p87
    %p90 = scmp.ne.s32.totalorder %s73, %s89
    %p91 = scmp.eq.s32.totalorder %s16, 0
    %p92 = por %p90, %p91
    %s93 = ssub.s32 %s18, %s32
    %p94 = scmp.eq.s32.totalorder %s93, 0
    %s96 = sadd.s32 %s95, 1
    %s97 = scalar_select %p94, %s95, %s96
    %p100 = pneg %p94
    %p101 = scmp.eq.s32.totalorder %s10, 3
    %p102 = por %p100, %p101
    %p103 = scmp.ne.s32.totalorder %s95, %s98
    %p104 = scmp.eq.s32.totalorder %s10, 0
    %p105 = por %p103, %p104
    %p106 = scmp.ne.s32.totalorder %s95, %s98
    %p107 = scmp.eq.s32.totalorder %s15, 3
    %p108 = por %p106, %p107
    %p109 = scmp.ne.s32.totalorder %s98, %s99
    %p110 = scmp.eq.s32.totalorder %s15, 0
    %p111 = por %p109, %p110
    %p112 = scmp.ne.s32.totalorder %s98, %s99
    %p113 = scmp.eq.s32.totalorder %s16, 3
    %p114 = por %p112, %p113
    %p116 = scmp.ne.s32.totalorder %s99, %s115
    %p117 = scmp.eq.s32.totalorder %s16, 0
    %p118 = por %p116, %p117
    %s119 = ssub.s32 %s18, %s32
    %p120 = scmp.eq.s32.totalorder %s119, 0
    %s122 = sadd.s32 %s121, 1
    %s123 = scalar_select %p120, %s121, %s122
    %p126 = pneg %p120
    %p127 = scmp.eq.s32.totalorder %s10, 3
    %p128 = por %p126, %p127
    %p129 = scmp.ne.s32.totalorder %s121, %s124
    %p130 = scmp.eq.s32.totalorder %s10, 0
    %p131 = por %p129, %p130
    %p132 = scmp.ne.s32.totalorder %s121, %s124
    %p133 = scmp.eq.s32.totalorder %s15, 3
    %p134 = por %p132, %p133
    %p135 = scmp.ne.s32.totalorder %s124, %s125
    %p136 = scmp.eq.s32.totalorder %s15, 0
    %p137 = por %p135, %p136
    %p138 = scmp.ne.s32.totalorder %s124, %s125
    %p139 = scmp.eq.s32.totalorder %s16, 3
    %p140 = por %p138, %p139
    %p142 = scmp.ne.s32.totalorder %s125, %s141
    %p143 = scmp.eq.s32.totalorder %s16, 0
    %p144 = por %p142, %p143
    %s145 = ssub.s32 %s17, %s36
    %s146 = ssub.s32 %s18, %s32
    %s147 = sor.u32 %s145, %s146
    %p148 = scmp.eq.s32.totalorder %s147, 0
    %s150 = sadd.s32 %s149, 1
    %s151 = scalar_select %p148, %s149, %s150
    %p154 = pneg %p148
    %p155 = scmp.eq.s32.totalorder %s10, 3
    %p156 = por %p154, %p155
    %p157 = scmp.ne.s32.totalorder %s149, %s152
    %p158 = scmp.eq.s32.totalorder %s10, 0
    %p159 = por %p157, %p158
    %p160 = scmp.ne.s32.totalorder %s149, %s152
    %p161 = scmp.eq.s32.totalorder %s15, 3
    %p162 = por %p160, %p161
    %p163 = scmp.ne.s32.totalorder %s152, %s153
    %p164 = scmp.eq.s32.totalorder %s15, 0
    %p165 = por %p163, %p164
    %p166 = scmp.ne.s32.totalorder %s152, %s153
    %p167 = scmp.eq.s32.totalorder %s16, 3
    %p168 = por %p166, %p167
    %p170 = scmp.ne.s32.totalorder %s153, %s169
    %p171 = scmp.eq.s32.totalorder %s16, 0
    %p172 = por %p170, %p171
    %p173 = scmp.le.s32.totalorder 1, %s10
    %p174 = scmp.lt.s32.totalorder %s10, 5
    %p175 = pnand %p173, %p174
    %p176 = pneg %p175
    // Predicated region
    $region9: #{fused_matmul.1} parent=5 // pred_check
      _
    $region10: #{fused_matmul.1} parent=5 // pred_check_branch
      %178 = sbr.rel (%p175) target = $region12
    $region11: #{fused_matmul.1} parent=5 // pred_region
      %s179 = ssub.s32 %s10, 1
      // Predicated region
      $region13: #{fused_matmul.1} parent=11 // pred_check
        %p180 = pneg %p85
      $region14: #{fused_matmul.1} parent=11 // pred_check_branch
        %182 = sbr.rel (%p180) target = $region16
      $region15: #{fused_matmul.1} parent=11 // pred_region
        %s183 = smul.u32 32, %s22
        %p184 = scmp.lt.s32.totalorder %s183, 31
        %s185 = scalar_select %p184, %s183, 31
        %p186 = scmp.lt.s32.totalorder %s21, 0
        %s187 = scalar_select %p186, %s21, 0
        %s188 = sadd.s32 %s187, %s185
        %s189 = smul.addr %s188, 4
        %s190 = scalar_lea.vmem %s1, %s189
        %s191 = smul.u32 32, %s22
      $region16: #{fused_matmul.1} parent=11 // pred_fallthru
        _
      // Predicated region
      $region17: #{fused_matmul.1} parent=11 // pred_check
        %p192 = pneg %p111
      $region18: #{fused_matmul.1} parent=11 // pred_check_branch
        %194 = sbr.rel (%p192) target = $region20
      $region19: #{fused_matmul.1} parent=11 // pred_region
        %p195 = scmp.lt.s32.totalorder %s21, 0
        %s196 = scalar_select %p195, %s21, 0
        %s197 = scalar_lea.vmem %s2, %s196
      $region20: #{fused_matmul.1} parent=11 // pred_fallthru
        _
      // Predicated region
      $region21: #{fused_matmul.1} parent=11 // pred_check
        %p198 = pneg %p137
      $region22: #{fused_matmul.1} parent=11 // pred_check_branch
        %200 = sbr.rel (%p198) target = $region24
      $region23: #{fused_matmul.1} parent=11 // pred_region
        %p201 = scmp.lt.s32.totalorder %s21, 0
        %s202 = scalar_select %p201, %s21, 0
        %s203 = scalar_lea.vmem %s3, %s202
      $region24: #{fused_matmul.1} parent=11 // pred_fallthru
        _
    $region12: #{fused_matmul.1} parent=5 // pred_fallthru
      _
    %p204 = scmp.lt.s32.totalorder %s10, 4
    // Predicated region
    $region25: #{fused_matmul.1} parent=5 // pred_check
      %p205 = pneg %p204
    $region26: #{fused_matmul.1} parent=5 // pred_check_branch
      %207 = sbr.rel (%p205) target = $region28
    $region27: #{fused_matmul.1} parent=5 // pred_region
      // Predicated region
      $region29: #{fused_matmul.1} parent=27 // pred_check
        %p208 = pneg %p51
      $region30: #{fused_matmul.1} parent=27 // pred_check_branch
        %210 = sbr.rel (%p208) target = $region32
      $region31: #{fused_matmul.1} parent=27 // pred_region
        %s211 = smul.u32 64, %s17
        %s212 = smul.u32 2, %s19
        %p213 = scmp.lt.s32.totalorder %s211, 255
        %s214 = scalar_select %p213, %s211, 255
        %p215 = scmp.lt.s32.totalorder %s212, 1
        %s216 = scalar_select %p215, %s212, 1
        %s217 = smul.addr %s214, 2
        %s218 = sadd.s32 %s216, %s217
        %s219 = smul.addr %s218, 4
        %s220 = scalar_lea.vmem %s0, %s219
        %s221 = smul.u32 64, %s17
        %s222 = smul.u32 2, %s19
      $region32: #{fused_matmul.1} parent=27 // pred_fallthru
        _
    $region28: #{fused_matmul.1} parent=5 // pred_fallthru
      _
    %p223 = scmp.le.s32.totalorder 1, %s10
    %p224 = scmp.lt.s32.totalorder %s10, 5
    %p225 = pnand %p223, %p224
    %p226 = pneg %p225
    // Predicated region
    $region33: #{fused_matmul.1} parent=5 // pred_check
      _
    $region34: #{fused_matmul.1} parent=5 // pred_check_branch
      %228 = sbr.rel (%p225) target = $region36
    $region35: #{fused_matmul.1} parent=5 // pred_region
      %s229 = ssub.s32 %s10, 1
      %s230 = smul.u32 64, %s20
      %s231 = smul.u32 2, %s22
      %p232 = scmp.lt.s32.totalorder %s230, 255
      %s233 = scalar_select %p232, %s230, 255
      %p234 = scmp.lt.s32.totalorder %s231, 1
      %s235 = scalar_select %p234, %s231, 1
      %s236 = smul.addr %s233, 2
      %s237 = sadd.s32 %s235, %s236
      %s238 = smul.addr %s237, 4
      %s239 = scalar_lea.vmem %s0, %s238
      %p240 = pneg %p57
      %p241 = pneg %p54
      %s242 = smul.u32 32, %s22
      %p243 = scmp.lt.s32.totalorder %s242, 31
      %s244 = scalar_select %p243, %s242, 31
      %p245 = scmp.lt.s32.totalorder %s21, 0
      %s246 = scalar_select %p245, %s21, 0
      %s247 = sadd.s32 %s246, %s244
      %s248 = smul.addr %s247, 4
      %s249 = scalar_lea.vmem %s1, %s248
      %p250 = pneg %p85
      %p251 = pneg %p82
      %p252 = scmp.lt.s32.totalorder %s21, 0
      %s253 = scalar_select %p252, %s21, 0
      %s254 = scalar_lea.vmem %s2, %s253
      %p255 = pneg %p111
      %p256 = pneg %p108
      %p257 = scmp.lt.s32.totalorder %s21, 0
      %s258 = scalar_select %p257, %s21, 0
      %s259 = scalar_lea.vmem %s3, %s258
      %p260 = pneg %p137
      %p261 = pneg %p134
      %p262 = pneg %p165
      %p263 = pneg %p162
      %s264 = smul.u32 64, %s20
      %p265 = scmp.lt.s32.totalorder %s264, 255
      %s266 = scalar_select %p265, %s264, 255
      %p267 = scmp.lt.s32.totalorder %s21, 0
      %s268 = scalar_select %p267, %s21, 0
      %s269 = sadd.s32 %s268, %s266
      %s270 = smul.addr %s269, 4
      %s271 = scalar_lea.vmem %s4, %s270
      %s272 = smul.u32 64, %s20
      %s273 = smul.u32 2, %s22
      %p274 = scmp.lt.s32.totalorder %s272, 255
      %s275 = scalar_select %p274, %s272, 255
      %p276 = scmp.lt.s32.totalorder %s273, 1
      %s277 = scalar_select %p276, %s273, 1
      %s278 = smul.addr %s275, 2
      %s279 = sadd.s32 %s277, %s278
      %s280 = smul.addr %s279, 4
      %s281 = scalar_lea.vmem %s0, %s280
      %s282 = smul.u32 64, %s20
      %s283 = smul.u32 2, %s22
      %s284 = smul.u32 32, %s22
      %p285 = scmp.lt.s32.totalorder %s284, 31
      %s286 = scalar_select %p285, %s284, 31
      %p287 = scmp.lt.s32.totalorder %s21, 0
      %s288 = scalar_select %p287, %s21, 0
      %s289 = sadd.s32 %s288, %s286
      %s290 = smul.addr %s289, 4
      %s291 = scalar_lea.vmem %s1, %s290
      %s292 = smul.u32 32, %s22
      %p293 = scmp.lt.s32.totalorder %s21, 0
      %s294 = scalar_select %p293, %s21, 0
      %s295 = scalar_lea.vmem %s2, %s294
      %p296 = scmp.lt.s32.totalorder %s21, 0
      %s297 = scalar_select %p296, %s21, 0
      %s298 = scalar_lea.vmem %s3, %s297
      %s299 = smul.u32 64, %s20
      %p300 = scmp.lt.s32.totalorder %s299, 255
      %s301 = scalar_select %p300, %s299, 255
      %p302 = scmp.lt.s32.totalorder %s21, 0
      %s303 = scalar_select %p302, %s21, 0
      %s304 = sadd.s32 %s303, %s301
      %s305 = smul.addr %s304, 4
      %s306 = scalar_lea.vmem %s4, %s305
      %s307 = smul.u32 64, %s20
      %p309 = scmp.eq.s32.totalorder %s22, 0
      // Predicated region
      $region37: #{fused_matmul.1} parent=35 // pred_check
        %p310 = pneg %p309
      $region38: #{fused_matmul.1} parent=35 // pred_check_branch
        %312 = sbr.rel (%p310) target = $region40
      $region39: #{fused_matmul.1} parent=35 // pred_region
        %313 = vst [vmem:[#allocation2] sm:$0xff] 0.0
        %314 = vst [vmem:[#allocation2 + $0x8] sm:$0xff] 0.0
        %315 = vst [vmem:[#allocation2 + $0x10] sm:$0xff] 0.0
        %316 = vst [vmem:[#allocation2 + $0x18] sm:$0xff] 0.0
        %317 = vst [vmem:[#allocation2 + $0x20] sm:$0xff] 0.0
        %318 = vst [vmem:[#allocation2 + $0x28] sm:$0xff] 0.0
        %319 = vst [vmem:[#allocation2 + $0x30] sm:$0xff] 0.0
        %320 = vst [vmem:[#allocation2 + $0x38] sm:$0xff] 0.0
        %321 = vst [vmem:[#allocation2 + $0x40] sm:$0xff] 0.0
        %322 = vst [vmem:[#allocation2 + $0x48] sm:$0xff] 0.0
        %323 = vst [vmem:[#allocation2 + $0x50] sm:$0xff] 0.0
        %324 = vst [vmem:[#allocation2 + $0x58] sm:$0xff] 0.0
        %325 = vst [vmem:[#allocation2 + $0x60] sm:$0xff] 0.0
        %326 = vst [vmem:[#allocation2 + $0x68] sm:$0xff] 0.0
        %327 = vst [vmem:[#allocation2 + $0x70] sm:$0xff] 0.0
        %328 = vst [vmem:[#allocation2 + $0x78] sm:$0xff] 0.0
        %329 = vst [vmem:[#allocation2 + $0x80] sm:$0xff] 0.0
        %330 = vst [vmem:[#allocation2 + $0x88] sm:$0xff] 0.0
        %331 = vst [vmem:[#allocation2 + $0x90] sm:$0xff] 0.0
        %332 = vst [vmem:[#allocation2 + $0x98] sm:$0xff] 0.0
        %333 = vst [vmem:[#allocation2 + $0xa0] sm:$0xff] 0.0
        %334 = vst [vmem:[#allocation2 + $0xa8] sm:$0xff] 0.0
        %335 = vst [vmem:[#allocation2 + $0xb0] sm:$0xff] 0.0
        %336 = vst [vmem:[#allocation2 + $0xb8] sm:$0xff] 0.0
        %337 = vst [vmem:[#allocation2 + $0xc0] sm:$0xff] 0.0
        %338 = vst [vmem:[#allocation2 + $0xc8] sm:$0xff] 0.0
        %339 = vst [vmem:[#allocation2 + $0xd0] sm:$0xff] 0.0
        %340 = vst [vmem:[#allocation2 + $0xd8] sm:$0xff] 0.0
        %341 = vst [vmem:[#allocation2 + $0xe0] sm:$0xff] 0.0
        %342 = vst [vmem:[#allocation2 + $0xe8] sm:$0xff] 0.0
        %343 = vst [vmem:[#allocation2 + $0xf0] sm:$0xff] 0.0
        %344 = vst [vmem:[#allocation2 + $0xf8] sm:$0xff] 0.0
        %345 = vst [vmem:[#allocation2 + $0x100] sm:$0xff] 0.0
        %346 = vst [vmem:[#allocation2 + $0x108] sm:$0xff] 0.0
        %347 = vst [vmem:[#allocation2 + $0x110] sm:$0xff] 0.0
        %348 = vst [vmem:[#allocation2 + $0x118] sm:$0xff] 0.0
        %349 = vst [vmem:[#allocation2 + $0x120] sm:$0xff] 0.0
        %350 = vst [vmem:[#allocation2 + $0x128] sm:$0xff] 0.0
        %351 = vst [vmem:[#allocation2 + $0x130] sm:$0xff] 0.0
        %352 = vst [vmem:[#allocation2 + $0x138] sm:$0xff] 0.0
        %353 = vst [vmem:[#allocation2 + $0x140] sm:$0xff] 0.0
        %354 = vst [vmem:[#allocation2 + $0x148] sm:$0xff] 0.0
        %355 = vst [vmem:[#allocation2 + $0x150] sm:$0xff] 0.0
        %356 = vst [vmem:[#allocation2 + $0x158] sm:$0xff] 0.0
        %357 = vst [vmem:[#allocation2 + $0x160] sm:$0xff] 0.0
        %358 = vst [vmem:[#allocation2 + $0x168] sm:$0xff] 0.0
        %359 = vst [vmem:[#allocation2 + $0x170] sm:$0xff] 0.0
        %360 = vst [vmem:[#allocation2 + $0x178] sm:$0xff] 0.0
        %361 = vst [vmem:[#allocation2 + $0x180] sm:$0xff] 0.0
        %362 = vst [vmem:[#allocation2 + $0x188] sm:$0xff] 0.0
        %363 = vst [vmem:[#allocation2 + $0x190] sm:$0xff] 0.0
        %364 = vst [vmem:[#allocation2 + $0x198] sm:$0xff] 0.0
        %365 = vst [vmem:[#allocation2 + $0x1a0] sm:$0xff] 0.0
        %366 = vst [vmem:[#allocation2 + $0x1a8] sm:$0xff] 0.0
        %367 = vst [vmem:[#allocation2 + $0x1b0] sm:$0xff] 0.0
        %368 = vst [vmem:[#allocation2 + $0x1b8] sm:$0xff] 0.0
        %369 = vst [vmem:[#allocation2 + $0x1c0] sm:$0xff] 0.0
        %370 = vst [vmem:[#allocation2 + $0x1c8] sm:$0xff] 0.0
        %371 = vst [vmem:[#allocation2 + $0x1d0] sm:$0xff] 0.0
        %372 = vst [vmem:[#allocation2 + $0x1d8] sm:$0xff] 0.0
        %373 = vst [vmem:[#allocation2 + $0x1e0] sm:$0xff] 0.0
        %374 = vst [vmem:[#allocation2 + $0x1e8] sm:$0xff] 0.0
        %375 = vst [vmem:[#allocation2 + $0x1f0] sm:$0xff] 0.0
        %376 = vst [vmem:[#allocation2 + $0x1f8] sm:$0xff] 0.0
      $region40: #{fused_matmul.1} parent=35 // pred_fallthru
        _
      %v377 = vld [vmem:[#allocation2] sm:$0xff]
      %v378 = vld [vmem:[#allocation2 + $0x8] sm:$0xff]
      %v379 = vld [vmem:[#allocation2 + $0x10] sm:$0xff]
      %v380 = vld [vmem:[#allocation2 + $0x18] sm:$0xff]
      %v381 = vld [vmem:[#allocation2 + $0x20] sm:$0xff]
      %v382 = vld [vmem:[#allocation2 + $0x28] sm:$0xff]
      %v383 = vld [vmem:[#allocation2 + $0x30] sm:$0xff]
      %v384 = vld [vmem:[#allocation2 + $0x38] sm:$0xff]
      %v385 = vld [vmem:[#allocation2 + $0x40] sm:$0xff]
      %v386 = vld [vmem:[#allocation2 + $0x48] sm:$0xff]
      %v387 = vld [vmem:[#allocation2 + $0x50] sm:$0xff]
      %v388 = vld [vmem:[#allocation2 + $0x58] sm:$0xff]
      %v389 = vld [vmem:[#allocation2 + $0x60] sm:$0xff]
      %v390 = vld [vmem:[#allocation2 + $0x68] sm:$0xff]
      %v391 = vld [vmem:[#allocation2 + $0x70] sm:$0xff]
      %v392 = vld [vmem:[#allocation2 + $0x78] sm:$0xff]
      %v393 = vld [vmem:[#allocation2 + $0x80] sm:$0xff]
      %v394 = vld [vmem:[#allocation2 + $0x88] sm:$0xff]
      %v395 = vld [vmem:[#allocation2 + $0x90] sm:$0xff]
      %v396 = vld [vmem:[#allocation2 + $0x98] sm:$0xff]
      %v397 = vld [vmem:[#allocation2 + $0xa0] sm:$0xff]
      %v398 = vld [vmem:[#allocation2 + $0xa8] sm:$0xff]
      %v399 = vld [vmem:[#allocation2 + $0xb0] sm:$0xff]
      %v400 = vld [vmem:[#allocation2 + $0xb8] sm:$0xff]
      %v401 = vld [vmem:[#allocation2 + $0xc0] sm:$0xff]
      %v402 = vld [vmem:[#allocation2 + $0xc8] sm:$0xff]
      %v403 = vld [vmem:[#allocation2 + $0xd0] sm:$0xff]
      %v404 = vld [vmem:[#allocation2 + $0xd8] sm:$0xff]
      %v405 = vld [vmem:[#allocation2 + $0xe0] sm:$0xff]
      %v406 = vld [vmem:[#allocation2 + $0xe8] sm:$0xff]
      %v407 = vld [vmem:[#allocation2 + $0xf0] sm:$0xff]
      %v408 = vld [vmem:[#allocation2 + $0xf8] sm:$0xff]
      %v409 = vld [vmem:[#allocation2 + $0x100] sm:$0xff]
      %v410 = vld [vmem:[#allocation2 + $0x108] sm:$0xff]
      %v411 = vld [vmem:[#allocation2 + $0x110] sm:$0xff]
      %v412 = vld [vmem:[#allocation2 + $0x118] sm:$0xff]
      %v413 = vld [vmem:[#allocation2 + $0x120] sm:$0xff]
      %v414 = vld [vmem:[#allocation2 + $0x128] sm:$0xff]
      %v415 = vld [vmem:[#allocation2 + $0x130] sm:$0xff]
      %v416 = vld [vmem:[#allocation2 + $0x138] sm:$0xff]
      %v417 = vld [vmem:[#allocation2 + $0x140] sm:$0xff]
      %v418 = vld [vmem:[#allocation2 + $0x148] sm:$0xff]
      %v419 = vld [vmem:[#allocation2 + $0x150] sm:$0xff]
      %v420 = vld [vmem:[#allocation2 + $0x158] sm:$0xff]
      %v421 = vld [vmem:[#allocation2 + $0x160] sm:$0xff]
      %v422 = vld [vmem:[#allocation2 + $0x168] sm:$0xff]
      %v423 = vld [vmem:[#allocation2 + $0x170] sm:$0xff]
      %v424 = vld [vmem:[#allocation2 + $0x178] sm:$0xff]
      %v425 = vld [vmem:[#allocation2 + $0x180] sm:$0xff]
      %v426 = vld [vmem:[#allocation2 + $0x188] sm:$0xff]
      %v427 = vld [vmem:[#allocation2 + $0x190] sm:$0xff]
      %v428 = vld [vmem:[#allocation2 + $0x198] sm:$0xff]
      %v429 = vld [vmem:[#allocation2 + $0x1a0] sm:$0xff]
      %v430 = vld [vmem:[#allocation2 + $0x1a8] sm:$0xff]
      %v431 = vld [vmem:[#allocation2 + $0x1b0] sm:$0xff]
      %v432 = vld [vmem:[#allocation2 + $0x1b8] sm:$0xff]
      %v433 = vld [vmem:[#allocation2 + $0x1c0] sm:$0xff]
      %v434 = vld [vmem:[#allocation2 + $0x1c8] sm:$0xff]
      %v435 = vld [vmem:[#allocation2 + $0x1d0] sm:$0xff]
      %v436 = vld [vmem:[#allocation2 + $0x1d8] sm:$0xff]
      %v437 = vld [vmem:[#allocation2 + $0x1e0] sm:$0xff]
      %v438 = vld [vmem:[#allocation2 + $0x1e8] sm:$0xff]
      %v439 = vld [vmem:[#allocation2 + $0x1f0] sm:$0xff]
      %v440 = vld [vmem:[#allocation2 + $0x1f8] sm:$0xff]
      %v441 = vld [vmem:[%s281] sm:$0xff]
      %v442 = vld [vmem:[%s281 + $0x8] sm:$0xff]
      %v443 = vld [vmem:[%s281 + $0x10] sm:$0xff]
      %v444 = vld [vmem:[%s281 + $0x18] sm:$0xff]
      %v445 = vld [vmem:[%s281 + $0x20] sm:$0xff]
      %v446 = vld [vmem:[%s281 + $0x28] sm:$0xff]
      %v447 = vld [vmem:[%s281 + $0x30] sm:$0xff]
      %v448 = vld [vmem:[%s281 + $0x38] sm:$0xff]
      %v449 = vld [vmem:[%s281 + $0x40] sm:$0xff]
      %v450 = vld [vmem:[%s281 + $0x48] sm:$0xff]
      %v451 = vld [vmem:[%s281 + $0x50] sm:$0xff]
      %v452 = vld [vmem:[%s281 + $0x58] sm:$0xff]
      %v453 = vld [vmem:[%s281 + $0x60] sm:$0xff]
      %v454 = vld [vmem:[%s281 + $0x68] sm:$0xff]
      %v455 = vld [vmem:[%s281 + $0x70] sm:$0xff]
      %v456 = vld [vmem:[%s281 + $0x78] sm:$0xff]
      %v457 = vld [vmem:[%s281 + $0x80] sm:$0xff]
      %v458 = vld [vmem:[%s281 + $0x88] sm:$0xff]
      %v459 = vld [vmem:[%s281 + $0x90] sm:$0xff]
      %v460 = vld [vmem:[%s281 + $0x98] sm:$0xff]
      %v461 = vld [vmem:[%s281 + $0xa0] sm:$0xff]
      %v462 = vld [vmem:[%s281 + $0xa8] sm:$0xff]
      %v463 = vld [vmem:[%s281 + $0xb0] sm:$0xff]
      %v464 = vld [vmem:[%s281 + $0xb8] sm:$0xff]
      %v465 = vld [vmem:[%s281 + $0xc0] sm:$0xff]
      %v466 = vld [vmem:[%s281 + $0xc8] sm:$0xff]
      %v467 = vld [vmem:[%s281 + $0xd0] sm:$0xff]
      %v468 = vld [vmem:[%s281 + $0xd8] sm:$0xff]
      %v469 = vld [vmem:[%s281 + $0xe0] sm:$0xff]
      %v470 = vld [vmem:[%s281 + $0xe8] sm:$0xff]
      %v471 = vld [vmem:[%s281 + $0xf0] sm:$0xff]
      %v472 = vld [vmem:[%s281 + $0xf8] sm:$0xff]
      %v473 = vld [vmem:[%s281 + $0x100] sm:$0xff]
      %v474 = vld [vmem:[%s281 + $0x108] sm:$0xff]
      %v475 = vld [vmem:[%s281 + $0x110] sm:$0xff]
      %v476 = vld [vmem:[%s281 + $0x118] sm:$0xff]
      %v477 = vld [vmem:[%s281 + $0x120] sm:$0xff]
      %v478 = vld [vmem:[%s281 + $0x128] sm:$0xff]
      %v479 = vld [vmem:[%s281 + $0x130] sm:$0xff]
      %v480 = vld [vmem:[%s281 + $0x138] sm:$0xff]
      %v481 = vld [vmem:[%s281 + $0x140] sm:$0xff]
      %v482 = vld [vmem:[%s281 + $0x148] sm:$0xff]
      %v483 = vld [vmem:[%s281 + $0x150] sm:$0xff]
      %v484 = vld [vmem:[%s281 + $0x158] sm:$0xff]
      %v485 = vld [vmem:[%s281 + $0x160] sm:$0xff]
      %v486 = vld [vmem:[%s281 + $0x168] sm:$0xff]
      %v487 = vld [vmem:[%s281 + $0x170] sm:$0xff]
      %v488 = vld [vmem:[%s281 + $0x178] sm:$0xff]
      %v489 = vld [vmem:[%s281 + $0x180] sm:$0xff]
      %v490 = vld [vmem:[%s281 + $0x188] sm:$0xff]
      %v491 = vld [vmem:[%s281 + $0x190] sm:$0xff]
      %v492 = vld [vmem:[%s281 + $0x198] sm:$0xff]
      %v493 = vld [vmem:[%s281 + $0x1a0] sm:$0xff]
      %v494 = vld [vmem:[%s281 + $0x1a8] sm:$0xff]
      %v495 = vld [vmem:[%s281 + $0x1b0] sm:$0xff]
      %v496 = vld [vmem:[%s281 + $0x1b8] sm:$0xff]
      %v497 = vld [vmem:[%s281 + $0x1c0] sm:$0xff]
      %v498 = vld [vmem:[%s281 + $0x1c8] sm:$0xff]
      %v499 = vld [vmem:[%s281 + $0x1d0] sm:$0xff]
      %v500 = vld [vmem:[%s281 + $0x1d8] sm:$0xff]
      %v501 = vld [vmem:[%s281 + $0x1e0] sm:$0xff]
      %v502 = vld [vmem:[%s281 + $0x1e8] sm:$0xff]
      %v503 = vld [vmem:[%s281 + $0x1f0] sm:$0xff]
      %v504 = vld [vmem:[%s281 + $0x1f8] sm:$0xff]
      %v505 = vld [vmem:[%s291] sm:$0xf]
      %v506 = vld [vmem:[%s291 + $0x4] sm:$0xf]
      %v507 = vld [vmem:[%s291 + $0x8] sm:$0xf]
      %v508 = vld [vmem:[%s291 + $0xc] sm:$0xf]
      %v509 = vld [vmem:[%s291 + $0x10] sm:$0xf]
      %v510 = vld [vmem:[%s291 + $0x14] sm:$0xf]
      %v511 = vld [vmem:[%s291 + $0x18] sm:$0xf]
      %v512 = vld [vmem:[%s291 + $0x1c] sm:$0xf]
      %v513 = vld [vmem:[%s291 + $0x20] sm:$0xf]
      %v514 = vld [vmem:[%s291 + $0x24] sm:$0xf]
      %v515 = vld [vmem:[%s291 + $0x28] sm:$0xf]
      %v516 = vld [vmem:[%s291 + $0x2c] sm:$0xf]
      %v517 = vld [vmem:[%s291 + $0x30] sm:$0xf]
      %v518 = vld [vmem:[%s291 + $0x34] sm:$0xf]
      %v519 = vld [vmem:[%s291 + $0x38] sm:$0xf]
      %v520 = vld [vmem:[%s291 + $0x3c] sm:$0xf]
      %v521 = vld [vmem:[%s291 + $0x40] sm:$0xf]
      %v522 = vld [vmem:[%s291 + $0x44] sm:$0xf]
      %v523 = vld [vmem:[%s291 + $0x48] sm:$0xf]
      %v524 = vld [vmem:[%s291 + $0x4c] sm:$0xf]
      %v525 = vld [vmem:[%s291 + $0x50] sm:$0xf]
      %v526 = vld [vmem:[%s291 + $0x54] sm:$0xf]
      %v527 = vld [vmem:[%s291 + $0x58] sm:$0xf]
      %v528 = vld [vmem:[%s291 + $0x5c] sm:$0xf]
      %v529 = vld [vmem:[%s291 + $0x60] sm:$0xf]
      %v530 = vld [vmem:[%s291 + $0x64] sm:$0xf]
      %v531 = vld [vmem:[%s291 + $0x68] sm:$0xf]
      %v532 = vld [vmem:[%s291 + $0x6c] sm:$0xf]
      %v533 = vld [vmem:[%s291 + $0x70] sm:$0xf]
      %v534 = vld [vmem:[%s291 + $0x74] sm:$0xf]
      %v535 = vld [vmem:[%s291 + $0x78] sm:$0xf]
      %v536 = vld [vmem:[%s291 + $0x7c] sm:$0xf]
      %v601 = vunpack.c.l.b16 %v441
      %v602 = vunpack.c.h.b16 %v441
      %v603 = vunpack.c.l.b16 %v442
      %v604 = vunpack.c.h.b16 %v442
      %v605 = vunpack.c.l.b16 %v443
      %v606 = vunpack.c.h.b16 %v443
      %v607 = vunpack.c.l.b16 %v444
      %v608 = vunpack.c.h.b16 %v444
      %v609 = vunpack.c.l.b16 %v445
      %v610 = vunpack.c.h.b16 %v445
      %v611 = vunpack.c.l.b16 %v446
      %v612 = vunpack.c.h.b16 %v446
      %v613 = vunpack.c.l.b16 %v447
      %v614 = vunpack.c.h.b16 %v447
      %v615 = vunpack.c.l.b16 %v448
      %v616 = vunpack.c.h.b16 %v448
      %v617 = vunpack.c.l.b16 %v449
      %v618 = vunpack.c.h.b16 %v449
      %v619 = vunpack.c.l.b16 %v450
      %v620 = vunpack.c.h.b16 %v450
      %v621 = vunpack.c.l.b16 %v451
      %v622 = vunpack.c.h.b16 %v451
      %v623 = vunpack.c.l.b16 %v452
      %v624 = vunpack.c.h.b16 %v452
      %v625 = vunpack.c.l.b16 %v453
      %v626 = vunpack.c.h.b16 %v453
      %v627 = vunpack.c.l.b16 %v454
      %v628 = vunpack.c.h.b16 %v454
      %v629 = vunpack.c.l.b16 %v455
      %v630 = vunpack.c.h.b16 %v455
      %v631 = vunpack.c.l.b16 %v456
      %v632 = vunpack.c.h.b16 %v456
      %v633 = vunpack.c.l.b16 %v457
      %v634 = vunpack.c.h.b16 %v457
      %v635 = vunpack.c.l.b16 %v458
      %v636 = vunpack.c.h.b16 %v458
      %v637 = vunpack.c.l.b16 %v459
      %v638 = vunpack.c.h.b16 %v459
      %v639 = vunpack.c.l.b16 %v460
      %v640 = vunpack.c.h.b16 %v460
      %v641 = vunpack.c.l.b16 %v461
      %v642 = vunpack.c.h.b16 %v461
      %v643 = vunpack.c.l.b16 %v462
      %v644 = vunpack.c.h.b16 %v462
      %v645 = vunpack.c.l.b16 %v463
      %v646 = vunpack.c.h.b16 %v463
      %v647 = vunpack.c.l.b16 %v464
      %v648 = vunpack.c.h.b16 %v464
      %v649 = vunpack.c.l.b16 %v465
      %v650 = vunpack.c.h.b16 %v465
      %v651 = vunpack.c.l.b16 %v466
      %v652 = vunpack.c.h.b16 %v466
      %v653 = vunpack.c.l.b16 %v467
      %v654 = vunpack.c.h.b16 %v467
      %v655 = vunpack.c.l.b16 %v468
      %v656 = vunpack.c.h.b16 %v468
      %v657 = vunpack.c.l.b16 %v469
      %v658 = vunpack.c.h.b16 %v469
      %v659 = vunpack.c.l.b16 %v470
      %v660 = vunpack.c.h.b16 %v470
      %v661 = vunpack.c.l.b16 %v471
      %v662 = vunpack.c.h.b16 %v471
      %v663 = vunpack.c.l.b16 %v472
      %v664 = vunpack.c.h.b16 %v472
      %v665 = vunpack.c.l.b16 %v473
      %v666 = vunpack.c.h.b16 %v473
      %v667 = vunpack.c.l.b16 %v474
      %v668 = vunpack.c.h.b16 %v474
      %v669 = vunpack.c.l.b16 %v475
      %v670 = vunpack.c.h.b16 %v475
      %v671 = vunpack.c.l.b16 %v476
      %v672 = vunpack.c.h.b16 %v476
      %v673 = vunpack.c.l.b16 %v477
      %v674 = vunpack.c.h.b16 %v477
      %v675 = vunpack.c.l.b16 %v478
      %v676 = vunpack.c.h.b16 %v478
      %v677 = vunpack.c.l.b16 %v479
      %v678 = vunpack.c.h.b16 %v479
      %v679 = vunpack.c.l.b16 %v480
      %v680 = vunpack.c.h.b16 %v480
      %v681 = vunpack.c.l.b16 %v481
      %v682 = vunpack.c.h.b16 %v481
      %v683 = vunpack.c.l.b16 %v482
      %v684 = vunpack.c.h.b16 %v482
      %v685 = vunpack.c.l.b16 %v483
      %v686 = vunpack.c.h.b16 %v483
      %v687 = vunpack.c.l.b16 %v484
      %v688 = vunpack.c.h.b16 %v484
      %v689 = vunpack.c.l.b16 %v485
      %v690 = vunpack.c.h.b16 %v485
      %v691 = vunpack.c.l.b16 %v486
      %v692 = vunpack.c.h.b16 %v486
      %v693 = vunpack.c.l.b16 %v487
      %v694 = vunpack.c.h.b16 %v487
      %v695 = vunpack.c.l.b16 %v488
      %v696 = vunpack.c.h.b16 %v488
      %v697 = vunpack.c.l.b16 %v489
      %v698 = vunpack.c.h.b16 %v489
      %v699 = vunpack.c.l.b16 %v490
      %v700 = vunpack.c.h.b16 %v490
      %v701 = vunpack.c.l.b16 %v491
      %v702 = vunpack.c.h.b16 %v491
      %v703 = vunpack.c.l.b16 %v492
      %v704 = vunpack.c.h.b16 %v492
      %v705 = vunpack.c.l.b16 %v493
      %v706 = vunpack.c.h.b16 %v493
      %v707 = vunpack.c.l.b16 %v494
      %v708 = vunpack.c.h.b16 %v494
      %v709 = vunpack.c.l.b16 %v495
      %v710 = vunpack.c.h.b16 %v495
      %v711 = vunpack.c.l.b16 %v496
      %v712 = vunpack.c.h.b16 %v496
      %v713 = vunpack.c.l.b16 %v497
      %v714 = vunpack.c.h.b16 %v497
      %v715 = vunpack.c.l.b16 %v498
      %v716 = vunpack.c.h.b16 %v498
      %v717 = vunpack.c.l.b16 %v499
      %v718 = vunpack.c.h.b16 %v499
      %v719 = vunpack.c.l.b16 %v500
      %v720 = vunpack.c.h.b16 %v500
      %v721 = vunpack.c.l.b16 %v501
      %v722 = vunpack.c.h.b16 %v501
      %v723 = vunpack.c.l.b16 %v502
      %v724 = vunpack.c.h.b16 %v502
      %v725 = vunpack.c.l.b16 %v503
      %v726 = vunpack.c.h.b16 %v503
      %v727 = vunpack.c.l.b16 %v504
      %v728 = vunpack.c.h.b16 %v504
      %v729 = vpack.c.b16 %v603, %v601
      %v730 = vpack.c.b16 %v604, %v602
      %v731 = vpack.c.b16 %v607, %v605
      %v732 = vpack.c.b16 %v608, %v606
      %v733 = vpack.c.b16 %v611, %v609
      %v734 = vpack.c.b16 %v612, %v610
      %v735 = vpack.c.b16 %v615, %v613
      %v736 = vpack.c.b16 %v616, %v614
      %v737 = vpack.c.b16 %v619, %v617
      %v738 = vpack.c.b16 %v620, %v618
      %v739 = vpack.c.b16 %v623, %v621
      %v740 = vpack.c.b16 %v624, %v622
      %v741 = vpack.c.b16 %v627, %v625
      %v742 = vpack.c.b16 %v628, %v626
      %v743 = vpack.c.b16 %v631, %v629
      %v744 = vpack.c.b16 %v632, %v630
      %v745 = vpack.c.b16 %v635, %v633
      %v746 = vpack.c.b16 %v636, %v634
      %v747 = vpack.c.b16 %v639, %v637
      %v748 = vpack.c.b16 %v640, %v638
      %v749 = vpack.c.b16 %v643, %v641
      %v750 = vpack.c.b16 %v644, %v642
      %v751 = vpack.c.b16 %v647, %v645
      %v752 = vpack.c.b16 %v648, %v646
      %v753 = vpack.c.b16 %v651, %v649
      %v754 = vpack.c.b16 %v652, %v650
      %v755 = vpack.c.b16 %v655, %v653
      %v756 = vpack.c.b16 %v656, %v654
      %v757 = vpack.c.b16 %v659, %v657
      %v758 = vpack.c.b16 %v660, %v658
      %v759 = vpack.c.b16 %v663, %v661
      %v760 = vpack.c.b16 %v664, %v662
      %v761 = vpack.c.b16 %v667, %v665
      %v762 = vpack.c.b16 %v668, %v666
      %v763 = vpack.c.b16 %v671, %v669
      %v764 = vpack.c.b16 %v672, %v670
      %v765 = vpack.c.b16 %v675, %v673
      %v766 = vpack.c.b16 %v676, %v674
      %v767 = vpack.c.b16 %v679, %v677
      %v768 = vpack.c.b16 %v680, %v678
      %v769 = vpack.c.b16 %v683, %v681
      %v770 = vpack.c.b16 %v684, %v682
      %v771 = vpack.c.b16 %v687, %v685
      %v772 = vpack.c.b16 %v688, %v686
      %v773 = vpack.c.b16 %v691, %v689
      %v774 = vpack.c.b16 %v692, %v690
      %v775 = vpack.c.b16 %v695, %v693
      %v776 = vpack.c.b16 %v696, %v694
      %v777 = vpack.c.b16 %v699, %v697
      %v778 = vpack.c.b16 %v700, %v698
      %v779 = vpack.c.b16 %v703, %v701
      %v780 = vpack.c.b16 %v704, %v702
      %v781 = vpack.c.b16 %v707, %v705
      %v782 = vpack.c.b16 %v708, %v706
      %v783 = vpack.c.b16 %v711, %v709
      %v784 = vpack.c.b16 %v712, %v710
      %v785 = vpack.c.b16 %v715, %v713
      %v786 = vpack.c.b16 %v716, %v714
      %v787 = vpack.c.b16 %v719, %v717
      %v788 = vpack.c.b16 %v720, %v718
      %v789 = vpack.c.b16 %v723, %v721
      %v790 = vpack.c.b16 %v724, %v722
      %v791 = vpack.c.b16 %v727, %v725
      %v792 = vpack.c.b16 %v728, %v726
      %v889 = vunpack.c.l.b16 %v505
      %v890 = vunpack.c.l.b16 %v506
      %v891 = vunpack.c.l.b16 %v507
      %v892 = vunpack.c.l.b16 %v508
      %v893 = vunpack.c.l.b16 %v509
      %v894 = vunpack.c.l.b16 %v510
      %v895 = vunpack.c.l.b16 %v511
      %v896 = vunpack.c.l.b16 %v512
      %v897 = vunpack.c.l.b16 %v513
      %v898 = vunpack.c.l.b16 %v514
      %v899 = vunpack.c.l.b16 %v515
      %v900 = vunpack.c.l.b16 %v516
      %v901 = vunpack.c.l.b16 %v517
      %v902 = vunpack.c.l.b16 %v518
      %v903 = vunpack.c.l.b16 %v519
      %v904 = vunpack.c.l.b16 %v520
      %v905 = vunpack.c.l.b16 %v521
      %v906 = vunpack.c.l.b16 %v522
      %v907 = vunpack.c.l.b16 %v523
      %v908 = vunpack.c.l.b16 %v524
      %v909 = vunpack.c.l.b16 %v525
      %v910 = vunpack.c.l.b16 %v526
      %v911 = vunpack.c.l.b16 %v527
      %v912 = vunpack.c.l.b16 %v528
      %v913 = vunpack.c.l.b16 %v529
      %v914 = vunpack.c.l.b16 %v530
      %v915 = vunpack.c.l.b16 %v531
      %v916 = vunpack.c.l.b16 %v532
      %v917 = vunpack.c.l.b16 %v533
      %v918 = vunpack.c.l.b16 %v534
      %v919 = vunpack.c.l.b16 %v535
      %v920 = vunpack.c.l.b16 %v536
      %v921 = vpack.c.b16 %v890, %v889
      %v922 = vpack.c.b16 %v892, %v891
      %v923 = vpack.c.b16 %v894, %v893
      %v924 = vpack.c.b16 %v896, %v895
      %v925 = vpack.c.b16 %v898, %v897
      %v926 = vpack.c.b16 %v900, %v899
      %v927 = vpack.c.b16 %v902, %v901
      %v928 = vpack.c.b16 %v904, %v903
      %v929 = vpack.c.b16 %v906, %v905
      %v930 = vpack.c.b16 %v908, %v907
      %v931 = vpack.c.b16 %v910, %v909
      %v932 = vpack.c.b16 %v912, %v911
      %v933 = vpack.c.b16 %v914, %v913
      %v934 = vpack.c.b16 %v916, %v915
      %v935 = vpack.c.b16 %v918, %v917
      %v936 = vpack.c.b16 %v920, %v919
      %953 = vmatprep.subr.bf16.mxu0 0
      %954 = vmatpush1.bf16.msra.mxu0 %v921
      %955 = vmatprep.subr.bf16.mxu0 0
      %956 = vmatpush1.bf16.msra.mxu0 %v922
      %957 = vmatprep.subr.bf16.mxu0 0
      %958 = vmatpush1.bf16.msra.mxu0 %v923
      %959 = vmatprep.subr.bf16.mxu0 0
      %960 = vmatpush1.bf16.msra.mxu0 %v924
      %961 = vmatprep.subr.bf16.mxu0 0
      %962 = vmatpush1.bf16.msra.mxu0 %v925
      %963 = vmatprep.subr.bf16.mxu0 0
      %964 = vmatpush1.bf16.msra.mxu0 %v926
      %965 = vmatprep.subr.bf16.mxu0 0
      %966 = vmatpush1.bf16.msra.mxu0 %v927
      %967 = vmatprep.subr.bf16.mxu0 0
      %968 = vmatpush1.bf16.msra.mxu0 %v928
      %969 = vmatprep.subr.bf16.mxu0 0
      %970 = vmatpush1.bf16.msra.mxu0 %v929
      %971 = vmatprep.subr.bf16.mxu0 0
      %972 = vmatpush1.bf16.msra.mxu0 %v930
      %973 = vmatprep.subr.bf16.mxu0 0
      %974 = vmatpush1.bf16.msra.mxu0 %v931
      %975 = vmatprep.subr.bf16.mxu0 0
      %976 = vmatpush1.bf16.msra.mxu0 %v932
      %977 = vmatprep.subr.bf16.mxu0 0
      %978 = vmatpush1.bf16.msra.mxu0 %v933
      %979 = vmatprep.subr.bf16.mxu0 0
      %980 = vmatpush1.bf16.msra.mxu0 %v934
      %981 = vmatprep.subr.bf16.mxu0 0
      %982 = vmatpush1.bf16.msra.mxu0 %v935
      %983 = vmatprep.subr.bf16.mxu0 0
      %984 = vmatpush1.bf16.msra.mxu0 %v936
      %985 = vmatprep.mubr.bf16.mxu0 %v730
      %986 = vmatmul.mubr.bf16.gmra.mrb[0].mxu0 %v729
      %v987 = vpop.f32.mrb[0].mxu0
      %v988 = vadd.f32 0.0, %v987
      %v989 = vpop.f32.mrb[0].mxu0
      %v990 = vpop.f32.mrb[0].mxu0
      %v991 = vadd.f32 0.0, %v990
      %v992 = vpop.f32.mrb[0].mxu0
      %993 = vmatprep.mubr.bf16.mxu0 %v732
      %994 = vmatmul.mubr.bf16.gmra.mrb[0].mxu0 %v731
      %v995 = vpop.f32.mrb[0].mxu0
      %v996 = vadd.f32 0.0, %v995
      %v997 = vpop.f32.mrb[0].mxu0
      %v998 = vpop.f32.mrb[0].mxu0
      %v999 = vadd.f32 0.0, %v998
      %v1000 = vpop.f32.mrb[0].mxu0
      %1001 = vmatprep.mubr.bf16.mxu0 %v734
      %1002 = vmatmul.mubr.bf16.gmra.mrb[0].mxu0 %v733
      %v1003 = vpop.f32.mrb[0].mxu0
      %v1004 = vadd.f32 0.0, %v1003
      %v1005 = vpop.f32.mrb[0].mxu0
      %v1006 = vpop.f32.mrb[0].mxu0
      %v1007 = vadd.f32 0.0, %v1006
      %v1008 = vpop.f32.mrb[0].mxu0
      %1009 = vmatprep.mubr.bf16.mxu0 %v736
      %1010 = vmatmul.mubr.bf16.gmra.mrb[0].mxu0 %v735
      %v1011 = vpop.f32.mrb[0].mxu0
      %v1012 = vadd.f32 0.0, %v1011
      %v1013 = vpop.f32.mrb[0].mxu0
      %v1014 = vpop.f32.mrb[0].mxu0
      %v1015 = vadd.f32 0.0, %v1014
      %v1016 = vpop.f32.mrb[0].mxu0
      %1017 = vmatprep.mubr.bf16.mxu0 %v738
      %1018 = vmatmul.mubr.bf16.gmra.mrb[0].mxu0 %v737
      %v1019 = vpop.f32.mrb[0].mxu0
      %v1020 = vadd.f32 0.0, %v1019
      %v1021 = vpop.f32.mrb[0].mxu0
      %v1022 = vpop.f32.mrb[0].mxu0
      %v1023 = vadd.f32 0.0, %v1022
      %v1024 = vpop.f32.mrb[0].mxu0
      %1025 = vmatprep.mubr.bf16.mxu0 %v740
      %1026 = vmatmul.mubr.bf16.gmra.mrb[0].mxu0 %v739
      %v1027 = vpop.f32.mrb[0].mxu0
      %v1028 = vadd.f32 0.0, %v1027
      %v1029 = vpop.f32.mrb[0].mxu0
      %v1030 = vpop.f32.mrb[0].mxu0
      %v1031 = vadd.f32 0.0, %v1030
      %v1032 = vpop.f32.mrb[0].mxu0
      %1033 = vmatprep.mubr.bf16.mxu0 %v742
      %1034 = vmatmul.mubr.bf16.gmra.mrb[0].mxu0 %v741
      %v1035 = vpop.f32.mrb[0].mxu0
      %v1036 = vadd.f32 0.0, %v1035
      %v1037 = vpop.f32.mrb[0].mxu0
      %v1038 = vpop.f32.mrb[0].mxu0
      %v1039 = vadd.f32 0.0, %v1038
      %v1040 = vpop.f32.mrb[0].mxu0
      %1041 = vmatprep.mubr.bf16.mxu0 %v744
      %1042 = vmatmul.mubr.bf16.gmra.mrb[0].mxu0 %v743
      %v1043 = vpop.f32.mrb[0].mxu0
      %v1044 = vadd.f32 0.0, %v1043
      %v1045 = vpop.f32.mrb[0].mxu0
      %v1046 = vpop.f32.mrb[0].mxu0
      %v1047 = vadd.f32 0.0, %v1046
      %v1048 = vpop.f32.mrb[0].mxu0
      %1049 = vmatprep.mubr.bf16.mxu0 %v746
      %1050 = vmatmul.mubr.bf16.gmra.mrb[0].mxu0 %v745
      %v1051 = vpop.f32.mrb[0].mxu0
      %v1052 = vadd.f32 0.0, %v1051
      %v1053 = vpop.f32.mrb[0].mxu0
      %v1054 = vpop.f32.mrb[0].mxu0
      %v1055 = vadd.f32 0.0, %v1054
      %v1056 = vpop.f32.mrb[0].mxu0
      %1057 = vmatprep.mubr.bf16.mxu0 %v748
      %1058 = vmatmul.mubr.bf16.gmra.mrb[0].mxu0 %v747
      %v1059 = vpop.f32.mrb[0].mxu0
      %v1060 = vadd.f32 0.0, %v1059
      %v1061 = vpop.f32.mrb[0].mxu0
      %v1062 = vpop.f32.mrb[0].mxu0
      %v1063 = vadd.f32 0.0, %v1062
      %v1064 = vpop.f32.mrb[0].mxu0
      %1065 = vmatprep.mubr.bf16.mxu0 %v750
      %1066 = vmatmul.mubr.bf16.gmra.mrb[0].mxu0 %v749
      %v1067 = vpop.f32.mrb[0].mxu0
      %v1068 = vadd.f32 0.0, %v1067
      %v1069 = vpop.f32.mrb[0].mxu0
      %v1070 = vpop.f32.mrb[0].mxu0
      %v1071 = vadd.f32 0.0, %v1070
      %v1072 = vpop.f32.mrb[0].mxu0
      %1073 = vmatprep.mubr.bf16.mxu0 %v752
      %1074 = vmatmul.mubr.bf16.gmra.mrb[0].mxu0 %v751
      %v1075 = vpop.f32.mrb[0].mxu0
      %v1076 = vadd.f32 0.0, %v1075
      %v1077 = vpop.f32.mrb[0].mxu0
      %v1078 = vpop.f32.mrb[0].mxu0
      %v1079 = vadd.f32 0.0, %v1078
      %v1080 = vpop.f32.mrb[0].mxu0
      %1081 = vmatprep.mubr.bf16.mxu0 %v754
      %1082 = vmatmul.mubr.bf16.gmra.mrb[0].mxu0 %v753
      %v1083 = vpop.f32.mrb[0].mxu0
      %v1084 = vadd.f32 0.0, %v1083
      %v1085 = vpop.f32.mrb[0].mxu0
      %v1086 = vpop.f32.mrb[0].mxu0
      %v1087 = vadd.f32 0.0, %v1086
      %v1088 = vpop.f32.mrb[0].mxu0
      %1089 = vmatprep.mubr.bf16.mxu0 %v756
      %1090 = vmatmul.mubr.bf16.gmra.mrb[0].mxu0 %v755
      %v1091 = vpop.f32.mrb[0].mxu0
      %v1092 = vadd.f32 0.0, %v1091
      %v1093 = vpop.f32.mrb[0].mxu0
      %v1094 = vpop.f32.mrb[0].mxu0
      %v1095 = vadd.f32 0.0, %v1094
      %v1096 = vpop.f32.mrb[0].mxu0
      %1097 = vmatprep.mubr.bf16.mxu0 %v758
      %1098 = vmatmul.mubr.bf16.gmra.mrb[0].mxu0 %v757
      %v1099 = vpop.f32.mrb[0].mxu0
      %v1100 = vadd.f32 0.0, %v1099
      %v1101 = vpop.f32.mrb[0].mxu0
      %v1102 = vpop.f32.mrb[0].mxu0
      %v1103 = vadd.f32 0.0, %v1102
      %v1104 = vpop.f32.mrb[0].mxu0
      %1105 = vmatprep.mubr.bf16.mxu0 %v760
      %1106 = vmatmul.mubr.bf16.gmra.mrb[0].mxu0 %v759
      %v1107 = vpop.f32.mrb[0].mxu0
      %v1108 = vadd.f32 0.0, %v1107
      %v1109 = vpop.f32.mrb[0].mxu0
      %v1110 = vpop.f32.mrb[0].mxu0
      %v1111 = vadd.f32 0.0, %v1110
      %v1112 = vpop.f32.mrb[0].mxu0
      %1113 = vmatprep.mubr.bf16.mxu0 %v762
      %1114 = vmatmul.mubr.bf16.gmra.mrb[0].mxu0 %v761
      %v1115 = vpop.f32.mrb[0].mxu0
      %v1116 = vadd.f32 0.0, %v1115
      %v1117 = vpop.f32.mrb[0].mxu0
      %v1118 = vpop.f32.mrb[0].mxu0
      %v1119 = vadd.f32 0.0, %v1118
      %v1120 = vpop.f32.mrb[0].mxu0
      %1121 = vmatprep.mubr.bf16.mxu0 %v764
      %1122 = vmatmul.mubr.bf16.gmra.mrb[0].mxu0 %v763
      %v1123 = vpop.f32.mrb[0].mxu0
      %v1124 = vadd.f32 0.0, %v1123
      %v1125 = vpop.f32.mrb[0].mxu0
      %v1126 = vpop.f32.mrb[0].mxu0
      %v1127 = vadd.f32 0.0, %v1126
      %v1128 = vpop.f32.mrb[0].mxu0
      %1129 = vmatprep.mubr.bf16.mxu0 %v766
      %1130 = vmatmul.mubr.bf16.gmra.mrb[0].mxu0 %v765
      %v1131 = vpop.f32.mrb[0].mxu0
      %v1132 = vadd.f32 0.0, %v1131
      %v1133 = vpop.f32.mrb[0].mxu0
      %v1134 = vpop.f32.mrb[0].mxu0
      %v1135 = vadd.f32 0.0, %v1134
      %v1136 = vpop.f32.mrb[0].mxu0
      %1137 = vmatprep.mubr.bf16.mxu0 %v768
      %1138 = vmatmul.mubr.bf16.gmra.mrb[0].mxu0 %v767
      %v1139 = vpop.f32.mrb[0].mxu0
      %v1140 = vadd.f32 0.0, %v1139
      %v1141 = vpop.f32.mrb[0].mxu0
      %v1142 = vpop.f32.mrb[0].mxu0
      %v1143 = vadd.f32 0.0, %v1142
      %v1144 = vpop.f32.mrb[0].mxu0
      %1145 = vmatprep.mubr.bf16.mxu0 %v770
      %1146 = vmatmul.mubr.bf16.gmra.mrb[0].mxu0 %v769
      %v1147 = vpop.f32.mrb[0].mxu0
      %v1148 = vadd.f32 0.0, %v1147
      %v1149 = vpop.f32.mrb[0].mxu0
      %v1150 = vpop.f32.mrb[0].mxu0
      %v1151 = vadd.f32 0.0, %v1150
      %v1152 = vpop.f32.mrb[0].mxu0
      %1153 = vmatprep.mubr.bf16.mxu0 %v772
      %1154 = vmatmul.mubr.bf16.gmra.mrb[0].mxu0 %v771
      %v1155 = vpop.f32.mrb[0].mxu0
      %v1156 = vadd.f32 0.0, %v1155
      %v1157 = vpop.f32.mrb[0].mxu0
      %v1158 = vpop.f32.mrb[0].mxu0
      %v1159 = vadd.f32 0.0, %v1158
      %v1160 = vpop.f32.mrb[0].mxu0
      %1161 = vmatprep.mubr.bf16.mxu0 %v774
      %1162 = vmatmul.mubr.bf16.gmra.mrb[0].mxu0 %v773
      %v1163 = vpop.f32.mrb[0].mxu0
      %v1164 = vadd.f32 0.0, %v1163
      %v1165 = vpop.f32.mrb[0].mxu0
      %v1166 = vpop.f32.mrb[0].mxu0
      %v1167 = vadd.f32 0.0, %v1166
      %v1168 = vpop.f32.mrb[0].mxu0
      %1169 = vmatprep.mubr.bf16.mxu0 %v776
      %1170 = vmatmul.mubr.bf16.gmra.mrb[0].mxu0 %v775
      %v1171 = vpop.f32.mrb[0].mxu0
      %v1172 = vadd.f32 0.0, %v1171
      %v1173 = vpop.f32.mrb[0].mxu0
      %v1174 = vpop.f32.mrb[0].mxu0
      %v1175 = vadd.f32 0.0, %v1174
      %v1176 = vpop.f32.mrb[0].mxu0
      %1177 = vmatprep.mubr.bf16.mxu0 %v778
      %1178 = vmatmul.mubr.bf16.gmra.mrb[0].mxu0 %v777
      %v1179 = vpop.f32.mrb[0].mxu0
      %v1180 = vadd.f32 0.0, %v1179
      %v1181 = vpop.f32.mrb[0].mxu0
      %v1182 = vpop.f32.mrb[0].mxu0
      %v1183 = vadd.f32 0.0, %v1182
      %v1184 = vpop.f32.mrb[0].mxu0
      %1185 = vmatprep.mubr.bf16.mxu0 %v780
      %1186 = vmatmul.mubr.bf16.gmra.mrb[0].mxu0 %v779
      %v1187 = vpop.f32.mrb[0].mxu0
      %v1188 = vadd.f32 0.0, %v1187
      %v1189 = vpop.f32.mrb[0].mxu0
      %v1190 = vpop.f32.mrb[0].mxu0
      %v1191 = vadd.f32 0.0, %v1190
      %v1192 = vpop.f32.mrb[0].mxu0
      %1193 = vmatprep.mubr.bf16.mxu0 %v782
      %1194 = vmatmul.mubr.bf16.gmra.mrb[0].mxu0 %v781
      %v1195 = vpop.f32.mrb[0].mxu0
      %v1196 = vadd.f32 0.0, %v1195
      %v1197 = vpop.f32.mrb[0].mxu0
      %v1198 = vpop.f32.mrb[0].mxu0
      %v1199 = vadd.f32 0.0, %v1198
      %v1200 = vpop.f32.mrb[0].mxu0
      %1201 = vmatprep.mubr.bf16.mxu0 %v784
      %1202 = vmatmul.mubr.bf16.gmra.mrb[0].mxu0 %v783
      %v1203 = vpop.f32.mrb[0].mxu0
      %v1204 = vadd.f32 0.0, %v1203
      %v1205 = vpop.f32.mrb[0].mxu0
      %v1206 = vpop.f32.mrb[0].mxu0
      %v1207 = vadd.f32 0.0, %v1206
      %v1208 = vpop.f32.mrb[0].mxu0
      %1209 = vmatprep.mubr.bf16.mxu0 %v786
      %1210 = vmatmul.mubr.bf16.gmra.mrb[0].mxu0 %v785
      %v1211 = vpop.f32.mrb[0].mxu0
      %v1212 = vadd.f32 0.0, %v1211
      %v1213 = vpop.f32.mrb[0].mxu0
      %v1214 = vpop.f32.mrb[0].mxu0
      %v1215 = vadd.f32 0.0, %v1214
      %v1216 = vpop.f32.mrb[0].mxu0
      %1217 = vmatprep.mubr.bf16.mxu0 %v788
      %1218 = vmatmul.mubr.bf16.gmra.mrb[0].mxu0 %v787
      %v1219 = vpop.f32.mrb[0].mxu0
      %v1220 = vadd.f32 0.0, %v1219
      %v1221 = vpop.f32.mrb[0].mxu0
      %v1222 = vpop.f32.mrb[0].mxu0
      %v1223 = vadd.f32 0.0, %v1222
      %v1224 = vpop.f32.mrb[0].mxu0
      %1225 = vmatprep.mubr.bf16.mxu0 %v790
      %1226 = vmatmul.mubr.bf16.gmra.mrb[0].mxu0 %v789
      %v1227 = vpop.f32.mrb[0].mxu0
      %v1228 = vadd.f32 0.0, %v1227
      %v1229 = vpop.f32.mrb[0].mxu0
      %v1230 = vpop.f32.mrb[0].mxu0
      %v1231 = vadd.f32 0.0, %v1230
      %v1232 = vpop.f32.mrb[0].mxu0
      %1233 = vmatprep.mubr.bf16.mxu0 %v792
      %1234 = vmatmul.mubr.bf16.gmra.mrb[0].mxu0 %v791
      %v1235 = vpop.f32.mrb[0].mxu0
      %v1236 = vadd.f32 0.0, %v1235
      %v1237 = vpop.f32.mrb[0].mxu0
      %v1238 = vpop.f32.mrb[0].mxu0
      %v1239 = vadd.f32 0.0, %v1238
      %v1240 = vpop.f32.mrb[0].mxu0
      %1241 = vdwg.mxu0
      %v1242 = vadd.f32 %v377, %v988
      %v1243 = vadd.f32 %v378, %v991
      %v1244 = vadd.f32 %v379, %v996
      %v1245 = vadd.f32 %v380, %v999
      %v1246 = vadd.f32 %v381, %v1004
      %v1247 = vadd.f32 %v382, %v1007
      %v1248 = vadd.f32 %v383, %v1012
      %v1249 = vadd.f32 %v384, %v1015
      %v1250 = vadd.f32 %v385, %v1020
      %v1251 = vadd.f32 %v386, %v1023
      %v1252 = vadd.f32 %v387, %v1028
      %v1253 = vadd.f32 %v388, %v1031
      %v1254 = vadd.f32 %v389, %v1036
      %v1255 = vadd.f32 %v390, %v1039
      %v1256 = vadd.f32 %v391, %v1044
      %v1257 = vadd.f32 %v392, %v1047
      %v1258 = vadd.f32 %v393, %v1052
      %v1259 = vadd.f32 %v394, %v1055
      %v1260 = vadd.f32 %v395, %v1060
      %v1261 = vadd.f32 %v396, %v1063
      %v1262 = vadd.f32 %v397, %v1068
      %v1263 = vadd.f32 %v398, %v1071
      %v1264 = vadd.f32 %v399, %v1076
      %v1265 = vadd.f32 %v400, %v1079
      %v1266 = vadd.f32 %v401, %v1084
      %v1267 = vadd.f32 %v402, %v1087
      %v1268 = vadd.f32 %v403, %v1092
      %v1269 = vadd.f32 %v404, %v1095
      %v1270 = vadd.f32 %v405, %v1100
      %v1271 = vadd.f32 %v406, %v1103
      %v1272 = vadd.f32 %v407, %v1108
      %v1273 = vadd.f32 %v408, %v1111
      %v1274 = vadd.f32 %v409, %v1116
      %v1275 = vadd.f32 %v410, %v1119
      %v1276 = vadd.f32 %v411, %v1124
      %v1277 = vadd.f32 %v412, %v1127
      %v1278 = vadd.f32 %v413, %v1132
      %v1279 = vadd.f32 %v414, %v1135
      %v1280 = vadd.f32 %v415, %v1140
      %v1281 = vadd.f32 %v416, %v1143
      %v1282 = vadd.f32 %v417, %v1148
      %v1283 = vadd.f32 %v418, %v1151
      %v1284 = vadd.f32 %v419, %v1156
      %v1285 = vadd.f32 %v420, %v1159
      %v1286 = vadd.f32 %v421, %v1164
      %v1287 = vadd.f32 %v422, %v1167
      %v1288 = vadd.f32 %v423, %v1172
      %v1289 = vadd.f32 %v424, %v1175
      %v1290 = vadd.f32 %v425, %v1180
      %v1291 = vadd.f32 %v426, %v1183
      %v1292 = vadd.f32 %v427, %v1188
      %v1293 = vadd.f32 %v428, %v1191
      %v1294 = vadd.f32 %v429, %v1196
      %v1295 = vadd.f32 %v430, %v1199
      %v1296 = vadd.f32 %v431, %v1204
      %v1297 = vadd.f32 %v432, %v1207
      %v1298 = vadd.f32 %v433, %v1212
      %v1299 = vadd.f32 %v434, %v1215
      %v1300 = vadd.f32 %v435, %v1220
      %v1301 = vadd.f32 %v436, %v1223
      %v1302 = vadd.f32 %v437, %v1228
      %v1303 = vadd.f32 %v438, %v1231
      %v1304 = vadd.f32 %v439, %v1236
      %v1305 = vadd.f32 %v440, %v1239
      %1306 = vst [vmem:[#allocation2] sm:$0xff] %v1242
      %1307 = vst [vmem:[#allocation2 + $0x8] sm:$0xff] %v1243
      %1308 = vst [vmem:[#allocation2 + $0x10] sm:$0xff] %v1244
      %1309 = vst [vmem:[#allocation2 + $0x18] sm:$0xff] %v1245
      %1310 = vst [vmem:[#allocation2 + $0x20] sm:$0xff] %v1246
      %1311 = vst [vmem:[#allocation2 + $0x28] sm:$0xff] %v1247
      %1312 = vst [vmem:[#allocation2 + $0x30] sm:$0xff] %v1248
      %1313 = vst [vmem:[#allocation2 + $0x38] sm:$0xff] %v1249
      %1314 = vst [vmem:[#allocation2 + $0x40] sm:$0xff] %v1250
      %1315 = vst [vmem:[#allocation2 + $0x48] sm:$0xff] %v1251
      %1316 = vst [vmem:[#allocation2 + $0x50] sm:$0xff] %v1252
      %1317 = vst [vmem:[#allocation2 + $0x58] sm:$0xff] %v1253
      %1318 = vst [vmem:[#allocation2 + $0x60] sm:$0xff] %v1254
      %1319 = vst [vmem:[#allocation2 + $0x68] sm:$0xff] %v1255
      %1320 = vst [vmem:[#allocation2 + $0x70] sm:$0xff] %v1256
      %1321 = vst [vmem:[#allocation2 + $0x78] sm:$0xff] %v1257
      %1322 = vst [vmem:[#allocation2 + $0x80] sm:$0xff] %v1258
      %1323 = vst [vmem:[#allocation2 + $0x88] sm:$0xff] %v1259
      %1324 = vst [vmem:[#allocation2 + $0x90] sm:$0xff] %v1260
      %1325 = vst [vmem:[#allocation2 + $0x98] sm:$0xff] %v1261
      %1326 = vst [vmem:[#allocation2 + $0xa0] sm:$0xff] %v1262
      %1327 = vst [vmem:[#allocation2 + $0xa8] sm:$0xff] %v1263
      %1328 = vst [vmem:[#allocation2 + $0xb0] sm:$0xff] %v1264
      %1329 = vst [vmem:[#allocation2 + $0xb8] sm:$0xff] %v1265
      %1330 = vst [vmem:[#allocation2 + $0xc0] sm:$0xff] %v1266
      %1331 = vst [vmem:[#allocation2 + $0xc8] sm:$0xff] %v1267
      %1332 = vst [vmem:[#allocation2 + $0xd0] sm:$0xff] %v1268
      %1333 = vst [vmem:[#allocation2 + $0xd8] sm:$0xff] %v1269
      %1334 = vst [vmem:[#allocation2 + $0xe0] sm:$0xff] %v1270
      %1335 = vst [vmem:[#allocation2 + $0xe8] sm:$0xff] %v1271
      %1336 = vst [vmem:[#allocation2 + $0xf0] sm:$0xff] %v1272
      %1337 = vst [vmem:[#allocation2 + $0xf8] sm:$0xff] %v1273
      %1338 = vst [vmem:[#allocation2 + $0x100] sm:$0xff] %v1274
      %1339 = vst [vmem:[#allocation2 + $0x108] sm:$0xff] %v1275
      %1340 = vst [vmem:[#allocation2 + $0x110] sm:$0xff] %v1276
      %1341 = vst [vmem:[#allocation2 + $0x118] sm:$0xff] %v1277
      %1342 = vst [vmem:[#allocation2 + $0x120] sm:$0xff] %v1278
      %1343 = vst [vmem:[#allocation2 + $0x128] sm:$0xff] %v1279
      %1344 = vst [vmem:[#allocation2 + $0x130] sm:$0xff] %v1280
      %1345 = vst [vmem:[#allocation2 + $0x138] sm:$0xff] %v1281
      %1346 = vst [vmem:[#allocation2 + $0x140] sm:$0xff] %v1282
      %1347 = vst [vmem:[#allocation2 + $0x148] sm:$0xff] %v1283
      %1348 = vst [vmem:[#allocation2 + $0x150] sm:$0xff] %v1284
      %1349 = vst [vmem:[#allocation2 + $0x158] sm:$0xff] %v1285
      %1350 = vst [vmem:[#allocation2 + $0x160] sm:$0xff] %v1286
      %1351 = vst [vmem:[#allocation2 + $0x168] sm:$0xff] %v1287
      %1352 = vst [vmem:[#allocation2 + $0x170] sm:$0xff] %v1288
      %1353 = vst [vmem:[#allocation2 + $0x178] sm:$0xff] %v1289
      %1354 = vst [vmem:[#allocation2 + $0x180] sm:$0xff] %v1290
      %1355 = vst [vmem:[#allocation2 + $0x188] sm:$0xff] %v1291
      %1356 = vst [vmem:[#allocation2 + $0x190] sm:$0xff] %v1292
      %1357 = vst [vmem:[#allocation2 + $0x198] sm:$0xff] %v1293
      %1358 = vst [vmem:[#allocation2 + $0x1a0] sm:$0xff] %v1294
      %1359 = vst [vmem:[#allocation2 + $0x1a8] sm:$0xff] %v1295
      %1360 = vst [vmem:[#allocation2 + $0x1b0] sm:$0xff] %v1296
      %1361 = vst [vmem:[#allocation2 + $0x1b8] sm:$0xff] %v1297
      %1362 = vst [vmem:[#allocation2 + $0x1c0] sm:$0xff] %v1298
      %1363 = vst [vmem:[#allocation2 + $0x1c8] sm:$0xff] %v1299
      %1364 = vst [vmem:[#allocation2 + $0x1d0] sm:$0xff] %v1300
      %1365 = vst [vmem:[#allocation2 + $0x1d8] sm:$0xff] %v1301
      %1366 = vst [vmem:[#allocation2 + $0x1e0] sm:$0xff] %v1302
      %1367 = vst [vmem:[#allocation2 + $0x1e8] sm:$0xff] %v1303
      %1368 = vst [vmem:[#allocation2 + $0x1f0] sm:$0xff] %v1304
      %1369 = vst [vmem:[#allocation2 + $0x1f8] sm:$0xff] %v1305
      // Predicated region
      $region41: #{fused_matmul.1} parent=35 // pred_check
        %p1370 = pneg %p309
      $region42: #{fused_matmul.1} parent=35 // pred_check_branch
        %1372 = sbr.rel (%p1370) target = $region44
      $region43: #{fused_matmul.1} parent=35 // pred_region
        %v1373 = vld [vmem:[#allocation2] sm:$0xff]
        %v1374 = vld [vmem:[#allocation2 + $0x8] sm:$0xff]
        %v1375 = vld [vmem:[#allocation2 + $0x10] sm:$0xff]
        %v1376 = vld [vmem:[#allocation2 + $0x18] sm:$0xff]
        %v1377 = vld [vmem:[#allocation2 + $0x20] sm:$0xff]
        %v1378 = vld [vmem:[#allocation2 + $0x28] sm:$0xff]
        %v1379 = vld [vmem:[#allocation2 + $0x30] sm:$0xff]
        %v1380 = vld [vmem:[#allocation2 + $0x38] sm:$0xff]
        %v1381 = vld [vmem:[#allocation2 + $0x40] sm:$0xff]
        %v1382 = vld [vmem:[#allocation2 + $0x48] sm:$0xff]
        %v1383 = vld [vmem:[#allocation2 + $0x50] sm:$0xff]
        %v1384 = vld [vmem:[#allocation2 + $0x58] sm:$0xff]
        %v1385 = vld [vmem:[#allocation2 + $0x60] sm:$0xff]
        %v1386 = vld [vmem:[#allocation2 + $0x68] sm:$0xff]
        %v1387 = vld [vmem:[#allocation2 + $0x70] sm:$0xff]
        %v1388 = vld [vmem:[#allocation2 + $0x78] sm:$0xff]
        %v1389 = vld [vmem:[#allocation2 + $0x80] sm:$0xff]
        %v1390 = vld [vmem:[#allocation2 + $0x88] sm:$0xff]
        %v1391 = vld [vmem:[#allocation2 + $0x90] sm:$0xff]
        %v1392 = vld [vmem:[#allocation2 + $0x98] sm:$0xff]
        %v1393 = vld [vmem:[#allocation2 + $0xa0] sm:$0xff]
        %v1394 = vld [vmem:[#allocation2 + $0xa8] sm:$0xff]
        %v1395 = vld [vmem:[#allocation2 + $0xb0] sm:$0xff]
        %v1396 = vld [vmem:[#allocation2 + $0xb8] sm:$0xff]
        %v1397 = vld [vmem:[#allocation2 + $0xc0] sm:$0xff]
        %v1398 = vld [vmem:[#allocation2 + $0xc8] sm:$0xff]
        %v1399 = vld [vmem:[#allocation2 + $0xd0] sm:$0xff]
        %v1400 = vld [vmem:[#allocation2 + $0xd8] sm:$0xff]
        %v1401 = vld [vmem:[#allocation2 + $0xe0] sm:$0xff]
        %v1402 = vld [vmem:[#allocation2 + $0xe8] sm:$0xff]
        %v1403 = vld [vmem:[#allocation2 + $0xf0] sm:$0xff]
        %v1404 = vld [vmem:[#allocation2 + $0xf8] sm:$0xff]
        %v1405 = vld [vmem:[#allocation2 + $0x100] sm:$0xff]
        %v1406 = vld [vmem:[#allocation2 + $0x108] sm:$0xff]
        %v1407 = vld [vmem:[#allocation2 + $0x110] sm:$0xff]
        %v1408 = vld [vmem:[#allocation2 + $0x118] sm:$0xff]
        %v1409 = vld [vmem:[#allocation2 + $0x120] sm:$0xff]
        %v1410 = vld [vmem:[#allocation2 + $0x128] sm:$0xff]
        %v1411 = vld [vmem:[#allocation2 + $0x130] sm:$0xff]
        %v1412 = vld [vmem:[#allocation2 + $0x138] sm:$0xff]
        %v1413 = vld [vmem:[#allocation2 + $0x140] sm:$0xff]
        %v1414 = vld [vmem:[#allocation2 + $0x148] sm:$0xff]
        %v1415 = vld [vmem:[#allocation2 + $0x150] sm:$0xff]
        %v1416 = vld [vmem:[#allocation2 + $0x158] sm:$0xff]
        %v1417 = vld [vmem:[#allocation2 + $0x160] sm:$0xff]
        %v1418 = vld [vmem:[#allocation2 + $0x168] sm:$0xff]
        %v1419 = vld [vmem:[#allocation2 + $0x170] sm:$0xff]
        %v1420 = vld [vmem:[#allocation2 + $0x178] sm:$0xff]
        %v1421 = vld [vmem:[#allocation2 + $0x180] sm:$0xff]
        %v1422 = vld [vmem:[#allocation2 + $0x188] sm:$0xff]
        %v1423 = vld [vmem:[#allocation2 + $0x190] sm:$0xff]
        %v1424 = vld [vmem:[#allocation2 + $0x198] sm:$0xff]
        %v1425 = vld [vmem:[#allocation2 + $0x1a0] sm:$0xff]
        %v1426 = vld [vmem:[#allocation2 + $0x1a8] sm:$0xff]
        %v1427 = vld [vmem:[#allocation2 + $0x1b0] sm:$0xff]
        %v1428 = vld [vmem:[#allocation2 + $0x1b8] sm:$0xff]
        %v1429 = vld [vmem:[#allocation2 + $0x1c0] sm:$0xff]
        %v1430 = vld [vmem:[#allocation2 + $0x1c8] sm:$0xff]
        %v1431 = vld [vmem:[#allocation2 + $0x1d0] sm:$0xff]
        %v1432 = vld [vmem:[#allocation2 + $0x1d8] sm:$0xff]
        %v1433 = vld [vmem:[#allocation2 + $0x1e0] sm:$0xff]
        %v1434 = vld [vmem:[#allocation2 + $0x1e8] sm:$0xff]
        %v1435 = vld [vmem:[#allocation2 + $0x1f0] sm:$0xff]
        %v1436 = vld [vmem:[#allocation2 + $0x1f8] sm:$0xff]
        %v1437 = vld [vmem:[%s295] sm:$0x1]
        %v1439 = vlaneseq
        %v1440 = vshrl.u32 %v1439, 7
        %v1441 = vsub.s32 0, %v1440
        %v1442 = vrot.slane %v1437, %v1441
        %v1444 = vmul.f32 %v1373, %v1442
        %v1445 = vmul.f32 %v1374, %v1442
        %v1446 = vmul.f32 %v1375, %v1442
        %v1447 = vmul.f32 %v1376, %v1442
        %v1448 = vmul.f32 %v1377, %v1442
        %v1449 = vmul.f32 %v1378, %v1442
        %v1450 = vmul.f32 %v1379, %v1442
        %v1451 = vmul.f32 %v1380, %v1442
        %v1452 = vmul.f32 %v1381, %v1442
        %v1453 = vmul.f32 %v1382, %v1442
        %v1454 = vmul.f32 %v1383, %v1442
        %v1455 = vmul.f32 %v1384, %v1442
        %v1456 = vmul.f32 %v1385, %v1442
        %v1457 = vmul.f32 %v1386, %v1442
        %v1458 = vmul.f32 %v1387, %v1442
        %v1459 = vmul.f32 %v1388, %v1442
        %v1460 = vmul.f32 %v1389, %v1442
        %v1461 = vmul.f32 %v1390, %v1442
        %v1462 = vmul.f32 %v1391, %v1442
        %v1463 = vmul.f32 %v1392, %v1442
        %v1464 = vmul.f32 %v1393, %v1442
        %v1465 = vmul.f32 %v1394, %v1442
        %v1466 = vmul.f32 %v1395, %v1442
        %v1467 = vmul.f32 %v1396, %v1442
        %v1468 = vmul.f32 %v1397, %v1442
        %v1469 = vmul.f32 %v1398, %v1442
        %v1470 = vmul.f32 %v1399, %v1442
        %v1471 = vmul.f32 %v1400, %v1442
        %v1472 = vmul.f32 %v1401, %v1442
        %v1473 = vmul.f32 %v1402, %v1442
        %v1474 = vmul.f32 %v1403, %v1442
        %v1475 = vmul.f32 %v1404, %v1442
        %v1476 = vmul.f32 %v1405, %v1442
        %v1477 = vmul.f32 %v1406, %v1442
        %v1478 = vmul.f32 %v1407, %v1442
        %v1479 = vmul.f32 %v1408, %v1442
        %v1480 = vmul.f32 %v1409, %v1442
        %v1481 = vmul.f32 %v1410, %v1442
        %v1482 = vmul.f32 %v1411, %v1442
        %v1483 = vmul.f32 %v1412, %v1442
        %v1484 = vmul.f32 %v1413, %v1442
        %v1485 = vmul.f32 %v1414, %v1442
        %v1486 = vmul.f32 %v1415, %v1442
        %v1487 = vmul.f32 %v1416, %v1442
        %v1488 = vmul.f32 %v1417, %v1442
        %v1489 = vmul.f32 %v1418, %v1442
        %v1490 = vmul.f32 %v1419, %v1442
        %v1491 = vmul.f32 %v1420, %v1442
        %v1492 = vmul.f32 %v1421, %v1442
        %v1493 = vmul.f32 %v1422, %v1442
        %v1494 = vmul.f32 %v1423, %v1442
        %v1495 = vmul.f32 %v1424, %v1442
        %v1496 = vmul.f32 %v1425, %v1442
        %v1497 = vmul.f32 %v1426, %v1442
        %v1498 = vmul.f32 %v1427, %v1442
        %v1499 = vmul.f32 %v1428, %v1442
        %v1500 = vmul.f32 %v1429, %v1442
        %v1501 = vmul.f32 %v1430, %v1442
        %v1502 = vmul.f32 %v1431, %v1442
        %v1503 = vmul.f32 %v1432, %v1442
        %v1504 = vmul.f32 %v1433, %v1442
        %v1505 = vmul.f32 %v1434, %v1442
        %v1506 = vmul.f32 %v1435, %v1442
        %v1507 = vmul.f32 %v1436, %v1442
        %v1508 = vld [vmem:[%s298] sm:$0x1]
        %v1510 = vlaneseq
        %v1511 = vshrl.u32 %v1510, 7
        %v1512 = vsub.s32 0, %v1511
        %v1513 = vrot.slane %v1508, %v1512
        %v1515 = vadd.f32 %v1444, %v1513
        %v1516 = vadd.f32 %v1445, %v1513
        %v1517 = vadd.f32 %v1446, %v1513
        %v1518 = vadd.f32 %v1447, %v1513
        %v1519 = vadd.f32 %v1448, %v1513
        %v1520 = vadd.f32 %v1449, %v1513
        %v1521 = vadd.f32 %v1450, %v1513
        %v1522 = vadd.f32 %v1451, %v1513
        %v1523 = vadd.f32 %v1452, %v1513
        %v1524 = vadd.f32 %v1453, %v1513
        %v1525 = vadd.f32 %v1454, %v1513
        %v1526 = vadd.f32 %v1455, %v1513
        %v1527 = vadd.f32 %v1456, %v1513
        %v1528 = vadd.f32 %v1457, %v1513
        %v1529 = vadd.f32 %v1458, %v1513
        %v1530 = vadd.f32 %v1459, %v1513
        %v1531 = vadd.f32 %v1460, %v1513
        %v1532 = vadd.f32 %v1461, %v1513
        %v1533 = vadd.f32 %v1462, %v1513
        %v1534 = vadd.f32 %v1463, %v1513
        %v1535 = vadd.f32 %v1464, %v1513
        %v1536 = vadd.f32 %v1465, %v1513
        %v1537 = vadd.f32 %v1466, %v1513
        %v1538 = vadd.f32 %v1467, %v1513
        %v1539 = vadd.f32 %v1468, %v1513
        %v1540 = vadd.f32 %v1469, %v1513
        %v1541 = vadd.f32 %v1470, %v1513
        %v1542 = vadd.f32 %v1471, %v1513
        %v1543 = vadd.f32 %v1472, %v1513
        %v1544 = vadd.f32 %v1473, %v1513
        %v1545 = vadd.f32 %v1474, %v1513
        %v1546 = vadd.f32 %v1475, %v1513
        %v1547 = vadd.f32 %v1476, %v1513
        %v1548 = vadd.f32 %v1477, %v1513
        %v1549 = vadd.f32 %v1478, %v1513
        %v1550 = vadd.f32 %v1479, %v1513
        %v1551 = vadd.f32 %v1480, %v1513
        %v1552 = vadd.f32 %v1481, %v1513
        %v1553 = vadd.f32 %v1482, %v1513
        %v1554 = vadd.f32 %v1483, %v1513
        %v1555 = vadd.f32 %v1484, %v1513
        %v1556 = vadd.f32 %v1485, %v1513
        %v1557 = vadd.f32 %v1486, %v1513
        %v1558 = vadd.f32 %v1487, %v1513
        %v1559 = vadd.f32 %v1488, %v1513
        %v1560 = vadd.f32 %v1489, %v1513
        %v1561 = vadd.f32 %v1490, %v1513
        %v1562 = vadd.f32 %v1491, %v1513
        %v1563 = vadd.f32 %v1492, %v1513
        %v1564 = vadd.f32 %v1493, %v1513
        %v1565 = vadd.f32 %v1494, %v1513
        %v1566 = vadd.f32 %v1495, %v1513
        %v1567 = vadd.f32 %v1496, %v1513
        %v1568 = vadd.f32 %v1497, %v1513
        %v1569 = vadd.f32 %v1498, %v1513
        %v1570 = vadd.f32 %v1499, %v1513
        %v1571 = vadd.f32 %v1500, %v1513
        %v1572 = vadd.f32 %v1501, %v1513
        %v1573 = vadd.f32 %v1502, %v1513
        %v1574 = vadd.f32 %v1503, %v1513
        %v1575 = vadd.f32 %v1504, %v1513
        %v1576 = vadd.f32 %v1505, %v1513
        %v1577 = vadd.f32 %v1506, %v1513
        %v1578 = vadd.f32 %v1507, %v1513
        %vm1579 = vcmp.gt.f32.partialorder %v1515, 0.0
        %vm1580 = vcmp.gt.f32.partialorder %v1516, 0.0
        %vm1581 = vcmp.gt.f32.partialorder %v1517, 0.0
        %vm1582 = vcmp.gt.f32.partialorder %v1518, 0.0
        %vm1583 = vcmp.gt.f32.partialorder %v1519, 0.0
        %vm1584 = vcmp.gt.f32.partialorder %v1520, 0.0
        %vm1585 = vcmp.gt.f32.partialorder %v1521, 0.0
        %vm1586 = vcmp.gt.f32.partialorder %v1522, 0.0
        %vm1587 = vcmp.gt.f32.partialorder %v1523, 0.0
        %vm1588 = vcmp.gt.f32.partialorder %v1524, 0.0
        %vm1589 = vcmp.gt.f32.partialorder %v1525, 0.0
        %vm1590 = vcmp.gt.f32.partialorder %v1526, 0.0
        %vm1591 = vcmp.gt.f32.partialorder %v1527, 0.0
        %vm1592 = vcmp.gt.f32.partialorder %v1528, 0.0
        %vm1593 = vcmp.gt.f32.partialorder %v1529, 0.0
        %vm1594 = vcmp.gt.f32.partialorder %v1530, 0.0
        %vm1595 = vcmp.gt.f32.partialorder %v1531, 0.0
        %vm1596 = vcmp.gt.f32.partialorder %v1532, 0.0
        %vm1597 = vcmp.gt.f32.partialorder %v1533, 0.0
        %vm1598 = vcmp.gt.f32.partialorder %v1534, 0.0
        %vm1599 = vcmp.gt.f32.partialorder %v1535, 0.0
        %vm1600 = vcmp.gt.f32.partialorder %v1536, 0.0
        %vm1601 = vcmp.gt.f32.partialorder %v1537, 0.0
        %vm1602 = vcmp.gt.f32.partialorder %v1538, 0.0
        %vm1603 = vcmp.gt.f32.partialorder %v1539, 0.0
        %vm1604 = vcmp.gt.f32.partialorder %v1540, 0.0
        %vm1605 = vcmp.gt.f32.partialorder %v1541, 0.0
        %vm1606 = vcmp.gt.f32.partialorder %v1542, 0.0
        %vm1607 = vcmp.gt.f32.partialorder %v1543, 0.0
        %vm1608 = vcmp.gt.f32.partialorder %v1544, 0.0
        %vm1609 = vcmp.gt.f32.partialorder %v1545, 0.0
        %vm1610 = vcmp.gt.f32.partialorder %v1546, 0.0
        %vm1611 = vcmp.gt.f32.partialorder %v1547, 0.0
        %vm1612 = vcmp.gt.f32.partialorder %v1548, 0.0
        %vm1613 = vcmp.gt.f32.partialorder %v1549, 0.0
        %vm1614 = vcmp.gt.f32.partialorder %v1550, 0.0
        %vm1615 = vcmp.gt.f32.partialorder %v1551, 0.0
        %vm1616 = vcmp.gt.f32.partialorder %v1552, 0.0
        %vm1617 = vcmp.gt.f32.partialorder %v1553, 0.0
        %vm1618 = vcmp.gt.f32.partialorder %v1554, 0.0
        %vm1619 = vcmp.gt.f32.partialorder %v1555, 0.0
        %vm1620 = vcmp.gt.f32.partialorder %v1556, 0.0
        %vm1621 = vcmp.gt.f32.partialorder %v1557, 0.0
        %vm1622 = vcmp.gt.f32.partialorder %v1558, 0.0
        %vm1623 = vcmp.gt.f32.partialorder %v1559, 0.0
        %vm1624 = vcmp.gt.f32.partialorder %v1560, 0.0
        %vm1625 = vcmp.gt.f32.partialorder %v1561, 0.0
        %vm1626 = vcmp.gt.f32.partialorder %v1562, 0.0
        %vm1627 = vcmp.gt.f32.partialorder %v1563, 0.0
        %vm1628 = vcmp.gt.f32.partialorder %v1564, 0.0
        %vm1629 = vcmp.gt.f32.partialorder %v1565, 0.0
        %vm1630 = vcmp.gt.f32.partialorder %v1566, 0.0
        %vm1631 = vcmp.gt.f32.partialorder %v1567, 0.0
        %vm1632 = vcmp.gt.f32.partialorder %v1568, 0.0
        %vm1633 = vcmp.gt.f32.partialorder %v1569, 0.0
        %vm1634 = vcmp.gt.f32.partialorder %v1570, 0.0
        %vm1635 = vcmp.gt.f32.partialorder %v1571, 0.0
        %vm1636 = vcmp.gt.f32.partialorder %v1572, 0.0
        %vm1637 = vcmp.gt.f32.partialorder %v1573, 0.0
        %vm1638 = vcmp.gt.f32.partialorder %v1574, 0.0
        %vm1639 = vcmp.gt.f32.partialorder %v1575, 0.0
        %vm1640 = vcmp.gt.f32.partialorder %v1576, 0.0
        %vm1641 = vcmp.gt.f32.partialorder %v1577, 0.0
        %vm1642 = vcmp.gt.f32.partialorder %v1578, 0.0
        %v1643 = vmul.f32 %v1515, 0.1
        %v1644 = vmul.f32 %v1516, 0.1
        %v1645 = vmul.f32 %v1517, 0.1
        %v1646 = vmul.f32 %v1518, 0.1
        %v1647 = vmul.f32 %v1519, 0.1
        %v1648 = vmul.f32 %v1520, 0.1
        %v1649 = vmul.f32 %v1521, 0.1
        %v1650 = vmul.f32 %v1522, 0.1
        %v1651 = vmul.f32 %v1523, 0.1
        %v1652 = vmul.f32 %v1524, 0.1
        %v1653 = vmul.f32 %v1525, 0.1
        %v1654 = vmul.f32 %v1526, 0.1
        %v1655 = vmul.f32 %v1527, 0.1
        %v1656 = vmul.f32 %v1528, 0.1
        %v1657 = vmul.f32 %v1529, 0.1
        %v1658 = vmul.f32 %v1530, 0.1
        %v1659 = vmul.f32 %v1531, 0.1
        %v1660 = vmul.f32 %v1532, 0.1
        %v1661 = vmul.f32 %v1533, 0.1
        %v1662 = vmul.f32 %v1534, 0.1
        %v1663 = vmul.f32 %v1535, 0.1
        %v1664 = vmul.f32 %v1536, 0.1
        %v1665 = vmul.f32 %v1537, 0.1
        %v1666 = vmul.f32 %v1538, 0.1
        %v1667 = vmul.f32 %v1539, 0.1
        %v1668 = vmul.f32 %v1540, 0.1
        %v1669 = vmul.f32 %v1541, 0.1
        %v1670 = vmul.f32 %v1542, 0.1
        %v1671 = vmul.f32 %v1543, 0.1
        %v1672 = vmul.f32 %v1544, 0.1
        %v1673 = vmul.f32 %v1545, 0.1
        %v1674 = vmul.f32 %v1546, 0.1
        %v1675 = vmul.f32 %v1547, 0.1
        %v1676 = vmul.f32 %v1548, 0.1
        %v1677 = vmul.f32 %v1549, 0.1
        %v1678 = vmul.f32 %v1550, 0.1
        %v1679 = vmul.f32 %v1551, 0.1
        %v1680 = vmul.f32 %v1552, 0.1
        %v1681 = vmul.f32 %v1553, 0.1
        %v1682 = vmul.f32 %v1554, 0.1
        %v1683 = vmul.f32 %v1555, 0.1
        %v1684 = vmul.f32 %v1556, 0.1
        %v1685 = vmul.f32 %v1557, 0.1
        %v1686 = vmul.f32 %v1558, 0.1
        %v1687 = vmul.f32 %v1559, 0.1
        %v1688 = vmul.f32 %v1560, 0.1
        %v1689 = vmul.f32 %v1561, 0.1
        %v1690 = vmul.f32 %v1562, 0.1
        %v1691 = vmul.f32 %v1563, 0.1
        %v1692 = vmul.f32 %v1564, 0.1
        %v1693 = vmul.f32 %v1565, 0.1
        %v1694 = vmul.f32 %v1566, 0.1
        %v1695 = vmul.f32 %v1567, 0.1
        %v1696 = vmul.f32 %v1568, 0.1
        %v1697 = vmul.f32 %v1569, 0.1
        %v1698 = vmul.f32 %v1570, 0.1
        %v1699 = vmul.f32 %v1571, 0.1
        %v1700 = vmul.f32 %v1572, 0.1
        %v1701 = vmul.f32 %v1573, 0.1
        %v1702 = vmul.f32 %v1574, 0.1
        %v1703 = vmul.f32 %v1575, 0.1
        %v1704 = vmul.f32 %v1576, 0.1
        %v1705 = vmul.f32 %v1577, 0.1
        %v1706 = vmul.f32 %v1578, 0.1
        %v1707 = vsel %vm1579, %v1515, %v1643
        %v1708 = vsel %vm1580, %v1516, %v1644
        %v1709 = vsel %vm1581, %v1517, %v1645
        %v1710 = vsel %vm1582, %v1518, %v1646
        %v1711 = vsel %vm1583, %v1519, %v1647
        %v1712 = vsel %vm1584, %v1520, %v1648
        %v1713 = vsel %vm1585, %v1521, %v1649
        %v1714 = vsel %vm1586, %v1522, %v1650
        %v1715 = vsel %vm1587, %v1523, %v1651
        %v1716 = vsel %vm1588, %v1524, %v1652
        %v1717 = vsel %vm1589, %v1525, %v1653
        %v1718 = vsel %vm1590, %v1526, %v1654
        %v1719 = vsel %vm1591, %v1527, %v1655
        %v1720 = vsel %vm1592, %v1528, %v1656
        %v1721 = vsel %vm1593, %v1529, %v1657
        %v1722 = vsel %vm1594, %v1530, %v1658
        %v1723 = vsel %vm1595, %v1531, %v1659
        %v1724 = vsel %vm1596, %v1532, %v1660
        %v1725 = vsel %vm1597, %v1533, %v1661
        %v1726 = vsel %vm1598, %v1534, %v1662
        %v1727 = vsel %vm1599, %v1535, %v1663
        %v1728 = vsel %vm1600, %v1536, %v1664
        %v1729 = vsel %vm1601, %v1537, %v1665
        %v1730 = vsel %vm1602, %v1538, %v1666
        %v1731 = vsel %vm1603, %v1539, %v1667
        %v1732 = vsel %vm1604, %v1540, %v1668
        %v1733 = vsel %vm1605, %v1541, %v1669
        %v1734 = vsel %vm1606, %v1542, %v1670
        %v1735 = vsel %vm1607, %v1543, %v1671
        %v1736 = vsel %vm1608, %v1544, %v1672
        %v1737 = vsel %vm1609, %v1545, %v1673
        %v1738 = vsel %vm1610, %v1546, %v1674
        %v1739 = vsel %vm1611, %v1547, %v1675
        %v1740 = vsel %vm1612, %v1548, %v1676
        %v1741 = vsel %vm1613, %v1549, %v1677
        %v1742 = vsel %vm1614, %v1550, %v1678
        %v1743 = vsel %vm1615, %v1551, %v1679
        %v1744 = vsel %vm1616, %v1552, %v1680
        %v1745 = vsel %vm1617, %v1553, %v1681
        %v1746 = vsel %vm1618, %v1554, %v1682
        %v1747 = vsel %vm1619, %v1555, %v1683
        %v1748 = vsel %vm1620, %v1556, %v1684
        %v1749 = vsel %vm1621, %v1557, %v1685
        %v1750 = vsel %vm1622, %v1558, %v1686
        %v1751 = vsel %vm1623, %v1559, %v1687
        %v1752 = vsel %vm1624, %v1560, %v1688
        %v1753 = vsel %vm1625, %v1561, %v1689
        %v1754 = vsel %vm1626, %v1562, %v1690
        %v1755 = vsel %vm1627, %v1563, %v1691
        %v1756 = vsel %vm1628, %v1564, %v1692
        %v1757 = vsel %vm1629, %v1565, %v1693
        %v1758 = vsel %vm1630, %v1566, %v1694
        %v1759 = vsel %vm1631, %v1567, %v1695
        %v1760 = vsel %vm1632, %v1568, %v1696
        %v1761 = vsel %vm1633, %v1569, %v1697
        %v1762 = vsel %vm1634, %v1570, %v1698
        %v1763 = vsel %vm1635, %v1571, %v1699
        %v1764 = vsel %vm1636, %v1572, %v1700
        %v1765 = vsel %vm1637, %v1573, %v1701
        %v1766 = vsel %vm1638, %v1574, %v1702
        %v1767 = vsel %vm1639, %v1575, %v1703
        %v1768 = vsel %vm1640, %v1576, %v1704
        %v1769 = vsel %vm1641, %v1577, %v1705
        %v1770 = vsel %vm1642, %v1578, %v1706
        %v1771 = vpack.c.bf16 %v1708, %v1707
        %v1772 = vpack.c.bf16 %v1710, %v1709
        %v1773 = vpack.c.bf16 %v1712, %v1711
        %v1774 = vpack.c.bf16 %v1714, %v1713
        %v1775 = vpack.c.bf16 %v1716, %v1715
        %v1776 = vpack.c.bf16 %v1718, %v1717
        %v1777 = vpack.c.bf16 %v1720, %v1719
        %v1778 = vpack.c.bf16 %v1722, %v1721
        %v1779 = vpack.c.bf16 %v1724, %v1723
        %v1780 = vpack.c.bf16 %v1726, %v1725
        %v1781 = vpack.c.bf16 %v1728, %v1727
        %v1782 = vpack.c.bf16 %v1730, %v1729
        %v1783 = vpack.c.bf16 %v1732, %v1731
        %v1784 = vpack.c.bf16 %v1734, %v1733
        %v1785 = vpack.c.bf16 %v1736, %v1735
        %v1786 = vpack.c.bf16 %v1738, %v1737
        %v1787 = vpack.c.bf16 %v1740, %v1739
        %v1788 = vpack.c.bf16 %v1742, %v1741
        %v1789 = vpack.c.bf16 %v1744, %v1743
        %v1790 = vpack.c.bf16 %v1746, %v1745
        %v1791 = vpack.c.bf16 %v1748, %v1747
        %v1792 = vpack.c.bf16 %v1750, %v1749
        %v1793 = vpack.c.bf16 %v1752, %v1751
        %v1794 = vpack.c.bf16 %v1754, %v1753
        %v1795 = vpack.c.bf16 %v1756, %v1755
        %v1796 = vpack.c.bf16 %v1758, %v1757
        %v1797 = vpack.c.bf16 %v1760, %v1759
        %v1798 = vpack.c.bf16 %v1762, %v1761
        %v1799 = vpack.c.bf16 %v1764, %v1763
        %v1800 = vpack.c.bf16 %v1766, %v1765
        %v1801 = vpack.c.bf16 %v1768, %v1767
        %v1802 = vpack.c.bf16 %v1770, %v1769
        %v1835 = vunpack.c.l.b16 %v1771
        %v1836 = vunpack.c.h.b16 %v1771
        %v1837 = vunpack.c.l.b16 %v1772
        %v1838 = vunpack.c.h.b16 %v1772
        %v1839 = vunpack.c.l.b16 %v1773
        %v1840 = vunpack.c.h.b16 %v1773
        %v1841 = vunpack.c.l.b16 %v1774
        %v1842 = vunpack.c.h.b16 %v1774
        %v1843 = vunpack.c.l.b16 %v1775
        %v1844 = vunpack.c.h.b16 %v1775
        %v1845 = vunpack.c.l.b16 %v1776
        %v1846 = vunpack.c.h.b16 %v1776
        %v1847 = vunpack.c.l.b16 %v1777
        %v1848 = vunpack.c.h.b16 %v1777
        %v1849 = vunpack.c.l.b16 %v1778
        %v1850 = vunpack.c.h.b16 %v1778
        %v1851 = vunpack.c.l.b16 %v1779
        %v1852 = vunpack.c.h.b16 %v1779
        %v1853 = vunpack.c.l.b16 %v1780
        %v1854 = vunpack.c.h.b16 %v1780
        %v1855 = vunpack.c.l.b16 %v1781
        %v1856 = vunpack.c.h.b16 %v1781
        %v1857 = vunpack.c.l.b16 %v1782
        %v1858 = vunpack.c.h.b16 %v1782
        %v1859 = vunpack.c.l.b16 %v1783
        %v1860 = vunpack.c.h.b16 %v1783
        %v1861 = vunpack.c.l.b16 %v1784
        %v1862 = vunpack.c.h.b16 %v1784
        %v1863 = vunpack.c.l.b16 %v1785
        %v1864 = vunpack.c.h.b16 %v1785
        %v1865 = vunpack.c.l.b16 %v1786
        %v1866 = vunpack.c.h.b16 %v1786
        %v1867 = vunpack.c.l.b16 %v1787
        %v1868 = vunpack.c.h.b16 %v1787
        %v1869 = vunpack.c.l.b16 %v1788
        %v1870 = vunpack.c.h.b16 %v1788
        %v1871 = vunpack.c.l.b16 %v1789
        %v1872 = vunpack.c.h.b16 %v1789
        %v1873 = vunpack.c.l.b16 %v1790
        %v1874 = vunpack.c.h.b16 %v1790
        %v1875 = vunpack.c.l.b16 %v1791
        %v1876 = vunpack.c.h.b16 %v1791
        %v1877 = vunpack.c.l.b16 %v1792
        %v1878 = vunpack.c.h.b16 %v1792
        %v1879 = vunpack.c.l.b16 %v1793
        %v1880 = vunpack.c.h.b16 %v1793
        %v1881 = vunpack.c.l.b16 %v1794
        %v1882 = vunpack.c.h.b16 %v1794
        %v1883 = vunpack.c.l.b16 %v1795
        %v1884 = vunpack.c.h.b16 %v1795
        %v1885 = vunpack.c.l.b16 %v1796
        %v1886 = vunpack.c.h.b16 %v1796
        %v1887 = vunpack.c.l.b16 %v1797
        %v1888 = vunpack.c.h.b16 %v1797
        %v1889 = vunpack.c.l.b16 %v1798
        %v1890 = vunpack.c.h.b16 %v1798
        %v1891 = vunpack.c.l.b16 %v1799
        %v1892 = vunpack.c.h.b16 %v1799
        %v1893 = vunpack.c.l.b16 %v1800
        %v1894 = vunpack.c.h.b16 %v1800
        %v1895 = vunpack.c.l.b16 %v1801
        %v1896 = vunpack.c.h.b16 %v1801
        %v1897 = vunpack.c.l.b16 %v1802
        %v1898 = vunpack.c.h.b16 %v1802
        %v1899 = vpack.c.b16 %v1835, %v1835
        %v1900 = vpack.c.b16 %v1836, %v1836
        %v1901 = vpack.c.b16 %v1837, %v1837
        %v1902 = vpack.c.b16 %v1838, %v1838
        %v1903 = vpack.c.b16 %v1839, %v1839
        %v1904 = vpack.c.b16 %v1840, %v1840
        %v1905 = vpack.c.b16 %v1841, %v1841
        %v1906 = vpack.c.b16 %v1842, %v1842
        %v1907 = vpack.c.b16 %v1843, %v1843
        %v1908 = vpack.c.b16 %v1844, %v1844
        %v1909 = vpack.c.b16 %v1845, %v1845
        %v1910 = vpack.c.b16 %v1846, %v1846
        %v1911 = vpack.c.b16 %v1847, %v1847
        %v1912 = vpack.c.b16 %v1848, %v1848
        %v1913 = vpack.c.b16 %v1849, %v1849
        %v1914 = vpack.c.b16 %v1850, %v1850
        %v1915 = vpack.c.b16 %v1851, %v1851
        %v1916 = vpack.c.b16 %v1852, %v1852
        %v1917 = vpack.c.b16 %v1853, %v1853
        %v1918 = vpack.c.b16 %v1854, %v1854
        %v1919 = vpack.c.b16 %v1855, %v1855
        %v1920 = vpack.c.b16 %v1856, %v1856
        %v1921 = vpack.c.b16 %v1857, %v1857
        %v1922 = vpack.c.b16 %v1858, %v1858
        %v1923 = vpack.c.b16 %v1859, %v1859
        %v1924 = vpack.c.b16 %v1860, %v1860
        %v1925 = vpack.c.b16 %v1861, %v1861
        %v1926 = vpack.c.b16 %v1862, %v1862
        %v1927 = vpack.c.b16 %v1863, %v1863
        %v1928 = vpack.c.b16 %v1864, %v1864
        %v1929 = vpack.c.b16 %v1865, %v1865
        %v1930 = vpack.c.b16 %v1866, %v1866
        %v1931 = vpack.c.b16 %v1867, %v1867
        %v1932 = vpack.c.b16 %v1868, %v1868
        %v1933 = vpack.c.b16 %v1869, %v1869
        %v1934 = vpack.c.b16 %v1870, %v1870
        %v1935 = vpack.c.b16 %v1871, %v1871
        %v1936 = vpack.c.b16 %v1872, %v1872
        %v1937 = vpack.c.b16 %v1873, %v1873
        %v1938 = vpack.c.b16 %v1874, %v1874
        %v1939 = vpack.c.b16 %v1875, %v1875
        %v1940 = vpack.c.b16 %v1876, %v1876
        %v1941 = vpack.c.b16 %v1877, %v1877
        %v1942 = vpack.c.b16 %v1878, %v1878
        %v1943 = vpack.c.b16 %v1879, %v1879
        %v1944 = vpack.c.b16 %v1880, %v1880
        %v1945 = vpack.c.b16 %v1881, %v1881
        %v1946 = vpack.c.b16 %v1882, %v1882
        %v1947 = vpack.c.b16 %v1883, %v1883
        %v1948 = vpack.c.b16 %v1884, %v1884
        %v1949 = vpack.c.b16 %v1885, %v1885
        %v1950 = vpack.c.b16 %v1886, %v1886
        %v1951 = vpack.c.b16 %v1887, %v1887
        %v1952 = vpack.c.b16 %v1888, %v1888
        %v1953 = vpack.c.b16 %v1889, %v1889
        %v1954 = vpack.c.b16 %v1890, %v1890
        %v1955 = vpack.c.b16 %v1891, %v1891
        %v1956 = vpack.c.b16 %v1892, %v1892
        %v1957 = vpack.c.b16 %v1893, %v1893
        %v1958 = vpack.c.b16 %v1894, %v1894
        %v1959 = vpack.c.b16 %v1895, %v1895
        %v1960 = vpack.c.b16 %v1896, %v1896
        %v1961 = vpack.c.b16 %v1897, %v1897
        %v1962 = vpack.c.b16 %v1898, %v1898
        %2027 = vst [vmem:[%s306] sm:$0xf] %v1899
        %2028 = vst [vmem:[%s306 + $0x4] sm:$0xf] %v1900
        %2029 = vst [vmem:[%s306 + $0x8] sm:$0xf] %v1901
        %2030 = vst [vmem:[%s306 + $0xc] sm:$0xf] %v1902
        %2031 = vst [vmem:[%s306 + $0x10] sm:$0xf] %v1903
        %2032 = vst [vmem:[%s306 + $0x14] sm:$0xf] %v1904
        %2033 = vst [vmem:[%s306 + $0x18] sm:$0xf] %v1905
        %2034 = vst [vmem:[%s306 + $0x1c] sm:$0xf] %v1906
        %2035 = vst [vmem:[%s306 + $0x20] sm:$0xf] %v1907
        %2036 = vst [vmem:[%s306 + $0x24] sm:$0xf] %v1908
        %2037 = vst [vmem:[%s306 + $0x28] sm:$0xf] %v1909
        %2038 = vst [vmem:[%s306 + $0x2c] sm:$0xf] %v1910
        %2039 = vst [vmem:[%s306 + $0x30] sm:$0xf] %v1911
        %2040 = vst [vmem:[%s306 + $0x34] sm:$0xf] %v1912
        %2041 = vst [vmem:[%s306 + $0x38] sm:$0xf] %v1913
        %2042 = vst [vmem:[%s306 + $0x3c] sm:$0xf] %v1914
        %2043 = vst [vmem:[%s306 + $0x40] sm:$0xf] %v1915
        %2044 = vst [vmem:[%s306 + $0x44] sm:$0xf] %v1916
        %2045 = vst [vmem:[%s306 + $0x48] sm:$0xf] %v1917
        %2046 = vst [vmem:[%s306 + $0x4c] sm:$0xf] %v1918
        %2047 = vst [vmem:[%s306 + $0x50] sm:$0xf] %v1919
        %2048 = vst [vmem:[%s306 + $0x54] sm:$0xf] %v1920
        %2049 = vst [vmem:[%s306 + $0x58] sm:$0xf] %v1921
        %2050 = vst [vmem:[%s306 + $0x5c] sm:$0xf] %v1922
        %2051 = vst [vmem:[%s306 + $0x60] sm:$0xf] %v1923
        %2052 = vst [vmem:[%s306 + $0x64] sm:$0xf] %v1924
        %2053 = vst [vmem:[%s306 + $0x68] sm:$0xf] %v1925
        %2054 = vst [vmem:[%s306 + $0x6c] sm:$0xf] %v1926
        %2055 = vst [vmem:[%s306 + $0x70] sm:$0xf] %v1927
        %2056 = vst [vmem:[%s306 + $0x74] sm:$0xf] %v1928
        %2057 = vst [vmem:[%s306 + $0x78] sm:$0xf] %v1929
        %2058 = vst [vmem:[%s306 + $0x7c] sm:$0xf] %v1930
        %2059 = vst [vmem:[%s306 + $0x80] sm:$0xf] %v1931
        %2060 = vst [vmem:[%s306 + $0x84] sm:$0xf] %v1932
        %2061 = vst [vmem:[%s306 + $0x88] sm:$0xf] %v1933
        %2062 = vst [vmem:[%s306 + $0x8c] sm:$0xf] %v1934
        %2063 = vst [vmem:[%s306 + $0x90] sm:$0xf] %v1935
        %2064 = vst [vmem:[%s306 + $0x94] sm:$0xf] %v1936
        %2065 = vst [vmem:[%s306 + $0x98] sm:$0xf] %v1937
        %2066 = vst [vmem:[%s306 + $0x9c] sm:$0xf] %v1938
        %2067 = vst [vmem:[%s306 + $0xa0] sm:$0xf] %v1939
        %2068 = vst [vmem:[%s306 + $0xa4] sm:$0xf] %v1940
        %2069 = vst [vmem:[%s306 + $0xa8] sm:$0xf] %v1941
        %2070 = vst [vmem:[%s306 + $0xac] sm:$0xf] %v1942
        %2071 = vst [vmem:[%s306 + $0xb0] sm:$0xf] %v1943
        %2072 = vst [vmem:[%s306 + $0xb4] sm:$0xf] %v1944
        %2073 = vst [vmem:[%s306 + $0xb8] sm:$0xf] %v1945
        %2074 = vst [vmem:[%s306 + $0xbc] sm:$0xf] %v1946
        %2075 = vst [vmem:[%s306 + $0xc0] sm:$0xf] %v1947
        %2076 = vst [vmem:[%s306 + $0xc4] sm:$0xf] %v1948
        %2077 = vst [vmem:[%s306 + $0xc8] sm:$0xf] %v1949
        %2078 = vst [vmem:[%s306 + $0xcc] sm:$0xf] %v1950
        %2079 = vst [vmem:[%s306 + $0xd0] sm:$0xf] %v1951
        %2080 = vst [vmem:[%s306 + $0xd4] sm:$0xf] %v1952
        %2081 = vst [vmem:[%s306 + $0xd8] sm:$0xf] %v1953
        %2082 = vst [vmem:[%s306 + $0xdc] sm:$0xf] %v1954
        %2083 = vst [vmem:[%s306 + $0xe0] sm:$0xf] %v1955
        %2084 = vst [vmem:[%s306 + $0xe4] sm:$0xf] %v1956
        %2085 = vst [vmem:[%s306 + $0xe8] sm:$0xf] %v1957
        %2086 = vst [vmem:[%s306 + $0xec] sm:$0xf] %v1958
        %2087 = vst [vmem:[%s306 + $0xf0] sm:$0xf] %v1959
        %2088 = vst [vmem:[%s306 + $0xf4] sm:$0xf] %v1960
        %2089 = vst [vmem:[%s306 + $0xf8] sm:$0xf] %v1961
        %2090 = vst [vmem:[%s306 + $0xfc] sm:$0xf] %v1962
      $region44: #{fused_matmul.1} parent=35 // pred_fallthru
        _
      %s2091 = smul.u32 64, %s20
      %p2092 = scmp.lt.s32.totalorder %s2091, 255
      %s2093 = scalar_select %p2092, %s2091, 255
      %p2094 = scmp.lt.s32.totalorder %s21, 0
      %s2095 = scalar_select %p2094, %s21, 0
      %s2096 = sadd.s32 %s2095, %s2093
      %s2097 = smul.addr %s2096, 4
      %s2098 = scalar_lea.vmem %s4, %s2097
      // Predicated region
      $region45: #{fused_matmul.1} parent=35 // pred_check
        %p2099 = pneg %p162
      $region46: #{fused_matmul.1} parent=35 // pred_check_branch
        %2101 = sbr.rel (%p2099) target = $region48
      $region47: #{fused_matmul.1} parent=35 // pred_region
        %s2102 = smul.u32 64, %s20
      $region48: #{fused_matmul.1} parent=35 // pred_fallthru
        _
    $region36: #{fused_matmul.1} parent=5 // pred_fallthru
      _
    %p2103 = scmp.le.s32.totalorder 2, %s10
    // Predicated region
    $region49: #{fused_matmul.1} parent=5 // pred_check
      %p2104 = pneg %p2103
    $region50: #{fused_matmul.1} parent=5 // pred_check_branch
      %2106 = sbr.rel (%p2104) target = $region52
    $region51: #{fused_matmul.1} parent=5 // pred_region
      %s2107 = ssub.s32 %s10, 2
      // Predicated region
      $region53: #{fused_matmul.1} parent=51 // pred_check
        %p2108 = pneg %p168
      $region54: #{fused_matmul.1} parent=51 // pred_check_branch
        %2110 = sbr.rel (%p2108) target = $region56
      $region55: #{fused_matmul.1} parent=51 // pred_region
        %s2111 = smul.u32 64, %s23
        %p2112 = scmp.lt.s32.totalorder %s2111, 255
        %s2113 = scalar_select %p2112, %s2111, 255
        %p2114 = scmp.lt.s32.totalorder %s24, 0
        %s2115 = scalar_select %p2114, %s24, 0
        %s2116 = sadd.s32 %s2115, %s2113
        %s2117 = smul.addr %s2116, 4
        %s2118 = scalar_lea.vmem %s4, %s2117
      $region56: #{fused_matmul.1} parent=51 // pred_fallthru
        _
    $region52: #{fused_matmul.1} parent=5 // pred_fallthru
      _
  $region6: #{fused_matmul.1} parent=0 // loop_footer
    %s14 = sadd.s32 1, %s10
  $region7: #{fused_matmul.1} parent=0 // loop_footer_branch
    %9 = sbr.rel target = $region3
  $region8: #{fused_matmul.1} parent=0 // loop_exit
    _

</llo_original>
